<compile_context>
chip_gen: v7x
topology: tpu7x:2x2x1
jax: 0.10.0
libtpu: 0.0.40
codegen_flags: <defaults>
</compile_context>

<pallas_src>
import functools

import jax
import jax.numpy as jnp
from jax.experimental import pallas as pl
from jax.experimental.pallas import tpu as pltpu

INPUT_SIZE = 24
HIDDEN1 = 128
HIDDEN2 = 64
OUTPUT_SIZE = 1


def _round_up(n, m):
    return ((n + m - 1) // m) * m


def mlp_kernel(x_ref, w1_ref, b1_ref, w2_ref, b2_ref, w3_ref, b3_ref, o_ref):
    # x_ref : [tb, F]          batch tile of inputs (batch in sublanes)
    # w1    : [F, H1]   b1 : [1, H1]
    # w2    : [H1, H2]  b2 : [1, H2]
    # w3    : [1, H2]   b3 : [1, 1]      (torch `output.weight` layout)
    # o_ref : [1, 1, tb]       lane-dense row of sigmoid outputs for this tile
    x = x_ref[...]

    h1 = jnp.dot(x, w1_ref[...], preferred_element_type=jnp.float32) + b1_ref[...]
    h1 = jnp.maximum(h1, 0.0)                                   # [tb, H1]

    h2 = jnp.dot(h1, w2_ref[...], preferred_element_type=jnp.float32) + b2_ref[...]
    h2 = jnp.maximum(h2, 0.0)                                   # [tb, H2]

    # Width-1 output layer: contract H2 of the weight row against H2 of h2
    # (q.k^T-style dimension numbers) so the result is a lane-dense [1, tb]
    # row instead of a [tb, 1] column (which would force masked vst stores).
    z = jax.lax.dot_general(
        w3_ref[...], h2,
        dimension_numbers=(((1,), (1,)), ((), ())),
        preferred_element_type=jnp.float32,
    )                                                           # [1, tb]
    z = z + b3_ref[...]                                         # (1,1) lane-broadcast
    o_ref[...] = jax.nn.sigmoid(z)[None]                        # [1, 1, tb]


def _choose_tile(B, preferred_tb):
    """Pick a batch tile: multiple of 8, divides round_up(B,8), keeps >=2 grid steps."""
    Bp = _round_up(B, 8)
    cap = min(preferred_tb, Bp)
    if Bp >= 16:
        # Keep at least 2 grid steps so v7x's two TensorCores both get work.
        cap = min(cap, max(8, (Bp // 2) // 8 * 8))
    cap = max(8, cap - cap % 8)
    tb = 8
    for cand in range(cap, 7, -8):
        if Bp % cand == 0:
            tb = cand
            break
    return tb, Bp


@functools.partial(jax.jit, static_argnames=("tile_b",))
def mlp_forward(x, w1, b1, w2, b2, w3, b3, *, tile_b=2048):
    """Fused MLP forward. x: [B, F] float32 -> [B, 1] float32."""
    B, Fin = x.shape
    H1 = w1.shape[1]
    H2 = w2.shape[1]

    tb, Bp = _choose_tile(B, tile_b)

    if Bp != B:
        # Fallback only when B is not a multiple of 8 (pads < 8 rows).
        x = jnp.pad(x, ((0, Bp - B), (0, 0)))

    num_tiles = Bp // tb

    cost = pl.CostEstimate(
        flops=2 * Bp * (Fin * H1 + H1 * H2 + H2),
        transcendentals=Bp,
        bytes_accessed=4 * (Bp * Fin + Bp + Fin * H1 + H1 + H1 * H2 + H2 + H2 + 1),
    )

    out = pl.pallas_call(
        mlp_kernel,
        out_shape=jax.ShapeDtypeStruct((num_tiles, 1, tb), jnp.float32),
        grid_spec=pltpu.PrefetchScalarGridSpec(
            num_scalar_prefetch=0,
            grid=(num_tiles,),
            in_specs=[
                pl.BlockSpec((tb, Fin), lambda i: (i, 0)),   # x tile (streamed)
                pl.BlockSpec((Fin, H1), lambda i: (0, 0)),   # w1 (VMEM-resident)
                pl.BlockSpec((1, H1), lambda i: (0, 0)),     # b1
                pl.BlockSpec((H1, H2), lambda i: (0, 0)),    # w2
                pl.BlockSpec((1, H2), lambda i: (0, 0)),     # b2
                pl.BlockSpec((1, H2), lambda i: (0, 0)),     # w3 (row layout)
                pl.BlockSpec((1, 1), lambda i: (0, 0)),      # b3
            ],
            out_specs=pl.BlockSpec((1, 1, tb), lambda i: (i, 0, 0)),
        ),
        compiler_params=pltpu.CompilerParams(
            dimension_semantics=("parallel",),   # shard batch tiles across v7x cores
            vmem_limit_bytes=32 * 1024 * 1024,   # lift v5e's 16 MiB scoped default
        ),
        cost_estimate=cost,
    )(x, w1, b1, w2, b2, w3, b3)

    # Layout plumbing only: (num_tiles, 1, tb) row-slab -> [B, 1]
    return out.reshape(Bp, 1)[:B]


def build_mlp_params(key):
    """Deterministic params; w1/w2 stored as [in, out] (torch weight.T),
    w3 stored as the torch weight row [1, H2]."""
    k1, k2, k3, k4, k5, k6 = jax.random.split(key, 6)

    def lin(kw, kb, fan_in, w_shape, b_shape):
        bound = 1.0 / jnp.sqrt(jnp.float32(fan_in))
        w = jax.random.uniform(kw, w_shape, jnp.float32, -bound, bound)
        b = jax.random.uniform(kb, b_shape, jnp.float32, -bound, bound)
        return w, b

    w1, b1 = lin(k1, k2, INPUT_SIZE, (INPUT_SIZE, HIDDEN1), (1, HIDDEN1))
    w2, b2 = lin(k3, k4, HIDDEN1, (HIDDEN1, HIDDEN2), (1, HIDDEN2))
    w3, b3 = lin(k5, k6, HIDDEN2, (OUTPUT_SIZE, HIDDEN2), (1, OUTPUT_SIZE))
    return w1, b1, w2, b2, w3, b3


def mlp_reference(x, w1, b1, w2, b2, w3, b3):
    hp = jax.lax.Precision.HIGHEST
    h1 = jnp.maximum(jnp.dot(x, w1, precision=hp) + b1, 0.0)
    h2 = jnp.maximum(jnp.dot(h1, w2, precision=hp) + b2, 0.0)
    z = jnp.dot(h2, w3.T, precision=hp) + b3
    return jax.nn.sigmoid(z)


if __name__ == "__main__":
    key = jax.random.PRNGKey(0)
    k_x, k_p = jax.random.split(key)
    params = build_mlp_params(k_p)

    # Main case: batch multiple of 8 -> no padding, tb=512, grid of 2 steps.
    batch = 1024
    x = jax.random.normal(k_x, (batch, INPUT_SIZE), jnp.float32)
    out = jax.block_until_ready(mlp_forward(x, *params))
    ref = mlp_reference(x, *params)
    assert out.shape == (batch, OUTPUT_SIZE) and out.dtype == jnp.float32
    assert bool(jnp.all((out > 0.0) & (out < 1.0)))
    assert bool(jnp.allclose(out, ref, atol=5e-5, rtol=5e-5))

    # Ragged fallback case: batch not a multiple of 8 (exercises the pad path).
    batch2 = 10
    x2 = jax.random.normal(jax.random.fold_in(k_x, 1), (batch2, INPUT_SIZE), jnp.float32)
    out2 = jax.block_until_ready(mlp_forward(x2, *params))
    ref2 = mlp_reference(x2, *params)
    assert out2.shape == (batch2, OUTPUT_SIZE)
    assert bool(jnp.allclose(out2, ref2, atol=5e-5, rtol=5e-5))

    print("KERNEL_OK")
</pallas_src>

<mosaic_0001>
module attributes {stable_mosaic.version = 11 : i64} {
  func.func @mlp_kernel(%arg0: i32, %arg1: memref<512x24xf32, #tpu.memory_space<vmem>>, %arg2: memref<24x128xf32, #tpu.memory_space<vmem>>, %arg3: memref<1x128xf32, #tpu.memory_space<vmem>>, %arg4: memref<128x64xf32, #tpu.memory_space<vmem>>, %arg5: memref<1x64xf32, #tpu.memory_space<vmem>>, %arg6: memref<1x64xf32, #tpu.memory_space<vmem>>, %arg7: memref<1x1xf32, #tpu.memory_space<vmem>>, %arg8: memref<1x1x512xf32, #tpu.memory_space<vmem>>) attributes {dimension_semantics = [#tpu.dimension_semantics<parallel>], iteration_bounds = array<i64: 2>, scalar_prefetch = 0 : i64, scratch_operands = 0 : i64, tpu.core_type = #tpu.core_type<tc>, window_params = [{transform_indices = @transform_0, window_bounds = array<i64: 512, 24>}, {pipeline_mode = #tpu.pipeline_mode<synchronous>, transform_indices = @transform_1, window_bounds = array<i64: 24, 128>}, {pipeline_mode = #tpu.pipeline_mode<synchronous>, transform_indices = @transform_2, window_bounds = array<i64: 1, 128>}, {pipeline_mode = #tpu.pipeline_mode<synchronous>, transform_indices = @transform_3, window_bounds = array<i64: 128, 64>}, {pipeline_mode = #tpu.pipeline_mode<synchronous>, transform_indices = @transform_4, window_bounds = array<i64: 1, 64>}, {pipeline_mode = #tpu.pipeline_mode<synchronous>, transform_indices = @transform_5, window_bounds = array<i64: 1, 64>}, {pipeline_mode = #tpu.pipeline_mode<synchronous>, transform_indices = @transform_6, window_bounds = array<i64: 1, 1>}, {transform_indices = @transform_7, window_bounds = array<i64: 1, 1, 512>}]} {
    %c0 = arith.constant 0 : index
    %c0_0 = arith.constant 0 : index
    %0 = vector.load %arg1[%c0, %c0_0] : memref<512x24xf32, #tpu.memory_space<vmem>>, vector<512x24xf32>
    %c0_1 = arith.constant 0 : index
    %c0_2 = arith.constant 0 : index
    %1 = vector.load %arg2[%c0_1, %c0_2] : memref<24x128xf32, #tpu.memory_space<vmem>>, vector<24x128xf32>
    %cst = arith.constant dense<0.000000e+00> : vector<512x128xf32>
    %2 = tpu.matmul %0, %1, %cst {dimension_numbers = #tpu.dot_dimension_numbers<[1], [0], [0], [1], [0, 0, 1, 1], [], []>} : vector<512x24xf32>, vector<24x128xf32>, vector<512x128xf32> -> vector<512x128xf32>
    %c0_3 = arith.constant 0 : index
    %c0_4 = arith.constant 0 : index
    %3 = vector.load %arg3[%c0_3, %c0_4] : memref<1x128xf32, #tpu.memory_space<vmem>>, vector<1x128xf32>
    %4 = vector.broadcast %3 : vector<1x128xf32> to vector<512x128xf32>
    %5 = arith.addf %2, %4 : vector<512x128xf32>
    %cst_5 = arith.constant 0.000000e+00 : f32
    %6 = vector.broadcast %cst_5 : f32 to vector<512x128xf32>
    %7 = arith.maximumf %5, %6 : vector<512x128xf32>
    %c0_6 = arith.constant 0 : index
    %c0_7 = arith.constant 0 : index
    %8 = vector.load %arg4[%c0_6, %c0_7] : memref<128x64xf32, #tpu.memory_space<vmem>>, vector<128x64xf32>
    %cst_8 = arith.constant dense<0.000000e+00> : vector<512x64xf32>
    %9 = tpu.matmul %7, %8, %cst_8 {dimension_numbers = #tpu.dot_dimension_numbers<[1], [0], [0], [1], [0, 0, 1, 1], [], []>} : vector<512x128xf32>, vector<128x64xf32>, vector<512x64xf32> -> vector<512x64xf32>
    %c0_9 = arith.constant 0 : index
    %c0_10 = arith.constant 0 : index
    %10 = vector.load %arg5[%c0_9, %c0_10] : memref<1x64xf32, #tpu.memory_space<vmem>>, vector<1x64xf32>
    %11 = vector.broadcast %10 : vector<1x64xf32> to vector<512x64xf32>
    %12 = arith.addf %9, %11 : vector<512x64xf32>
    %cst_11 = arith.constant 0.000000e+00 : f32
    %13 = vector.broadcast %cst_11 : f32 to vector<512x64xf32>
    %14 = arith.maximumf %12, %13 : vector<512x64xf32>
    %c0_12 = arith.constant 0 : index
    %c0_13 = arith.constant 0 : index
    %15 = vector.load %arg6[%c0_12, %c0_13] : memref<1x64xf32, #tpu.memory_space<vmem>>, vector<1x64xf32>
    %cst_14 = arith.constant dense<0.000000e+00> : vector<1x512xf32>
    %16 = tpu.matmul %15, %14, %cst_14 {dimension_numbers = #tpu.dot_dimension_numbers<[1], [1], [0], [0], [0, 0, 1, 0], [], []>} : vector<1x64xf32>, vector<512x64xf32>, vector<1x512xf32> -> vector<1x512xf32>
    %c0_15 = arith.constant 0 : index
    %c0_16 = arith.constant 0 : index
    %17 = vector.load %arg7[%c0_15, %c0_16] : memref<1x1xf32, #tpu.memory_space<vmem>>, vector<1x1xf32>
    %18 = vector.broadcast %17 : vector<1x1xf32> to vector<1x512xf32>
    %19 = arith.addf %16, %18 : vector<1x512xf32>
    %20 = arith.negf %19 : vector<1x512xf32>
    %21 = math.exp %20 : vector<1x512xf32>
    %cst_17 = arith.constant 1.000000e+00 : f32
    %22 = vector.broadcast %cst_17 : f32 to vector<1x512xf32>
    %23 = arith.addf %22, %21 : vector<1x512xf32>
    %24 = arith.divf %22, %23 : vector<1x512xf32>
    %25 = vector.shape_cast %24 : vector<1x512xf32> to vector<1x1x512xf32>
    %c0_18 = arith.constant 0 : index
    %c0_19 = arith.constant 0 : index
    %c0_20 = arith.constant 0 : index
    %26 = vector.load %arg8[%c0_18, %c0_19, %c0_20] : memref<1x1x512xf32, #tpu.memory_space<vmem>>, vector<1x1x512xf32>
    tpu.vector_store %arg8[%c0_18, %c0_19, %c0_20], %25 {strides = array<i32>} : memref<1x1x512xf32, #tpu.memory_space<vmem>>, vector<1x1x512xf32>,
    return
  }
  func.func @transform_0(%arg0: i32) -> (i32, i32) {
    %c0_i32 = arith.constant 0 : i32
    %c0_i32_0 = arith.constant 0 : i32
    return %arg0, %c0_i32 : i32, i32
  }
  func.func @transform_1(%arg0: i32) -> (i32, i32) {
    %c0_i32 = arith.constant 0 : i32
    %c0_i32_0 = arith.constant 0 : i32
    %c0_i32_1 = arith.constant 0 : i32
    return %c0_i32, %c0_i32_0 : i32, i32
  }
  func.func @transform_2(%arg0: i32) -> (i32, i32) {
    %c0_i32 = arith.constant 0 : i32
    %c0_i32_0 = arith.constant 0 : i32
    %c0_i32_1 = arith.constant 0 : i32
    return %c0_i32, %c0_i32_0 : i32, i32
  }
  func.func @transform_3(%arg0: i32) -> (i32, i32) {
    %c0_i32 = arith.constant 0 : i32
    %c0_i32_0 = arith.constant 0 : i32
    %c0_i32_1 = arith.constant 0 : i32
    return %c0_i32, %c0_i32_0 : i32, i32
  }
  func.func @transform_4(%arg0: i32) -> (i32, i32) {
    %c0_i32 = arith.constant 0 : i32
    %c0_i32_0 = arith.constant 0 : i32
    %c0_i32_1 = arith.constant 0 : i32
    return %c0_i32, %c0_i32_0 : i32, i32
  }
  func.func @transform_5(%arg0: i32) -> (i32, i32) {
    %c0_i32 = arith.constant 0 : i32
    %c0_i32_0 = arith.constant 0 : i32
    %c0_i32_1 = arith.constant 0 : i32
    return %c0_i32, %c0_i32_0 : i32, i32
  }
  func.func @transform_6(%arg0: i32) -> (i32, i32) {
    %c0_i32 = arith.constant 0 : i32
    %c0_i32_0 = arith.constant 0 : i32
    %c0_i32_1 = arith.constant 0 : i32
    return %c0_i32, %c0_i32_0 : i32, i32
  }
  func.func @transform_7(%arg0: i32) -> (i32, i32, i32) {
    %c0_i32 = arith.constant 0 : i32
    %c0_i32_0 = arith.constant 0 : i32
    %c0_i32_1 = arith.constant 0 : i32
    return %arg0, %c0_i32, %c0_i32_0 : i32, i32, i32
  }
}

</mosaic_0001>

<llo_original>
// kernel: mlp_forward.1
$region0: #{mlp_forward.1}
  #allocation0 [shape = 'u32[]', space=smem, size = 0x4, offset = 0x4, fixed_abs, tag = 'smem constant byte address 0x4 - core index']
  #allocation1 [shape = 'u32[144,128]{1,0:T(1,128)}', space=vmem, size = 0x12000, scoped, tag = 'internal scratch']
  #allocation2 [shape = 'f32[1,1]{1,0:T(1,128)S(1)}', space=vmem, size = 0x200, scoped, tag = 'scoped memory for mlp_forward.1']
  %s0 = inlined_call_operand.vmem [shape: f32[1024,24], index: 0, kind: input, shape index: {}]
  %s1 = inlined_call_operand.vmem [shape: f32[24,128], index: 1, kind: input, shape index: {}]
  %s2 = inlined_call_operand.vmem [shape: f32[1,128], index: 2, kind: input, shape index: {}]
  %s3 = inlined_call_operand.vmem [shape: f32[128,64], index: 3, kind: input, shape index: {}]
  %s4 = inlined_call_operand.vmem [shape: f32[1,64], index: 4, kind: input, shape index: {}]
  %s5 = inlined_call_operand.vmem [shape: f32[1,64], index: 5, kind: input, shape index: {}]
  %s6 = inlined_call_operand.<no memory space> [shape: f32[1,1], index: 6, kind: input, shape index: {}]
  %s7 = inlined_call_operand.hbm [shape: f32[2,1,512], index: 7, kind: output, shape index: {}]
  %s8 = sld [smem:[#allocation0]]
  $region61: #{mlp_forward.1} parent=0
    _
  %s10 = ssub.s32 1, %s8
  %s11 = scalar_select 0, %s10, %s8
  %v12 = vstv %s6
  %13 = vst [vmem:[#allocation2] sm:$0x1] %v12
  $region1: #{mlp_forward.1} parent=0
    #allocation3 [shape = 'u8[4096]{0}', space=vmem, size = 0x1000, scoped, tag = 'output window, operand 0']
    #allocation4 [shape = 's32[2]{0}', space=sflag, size = 0x8, scoped, tag = 'scoped memory for mlp_forward.1']
    %14 = vsyncpa [#allocation4], 0
    %s15 = scalar_lea.sflag [#allocation4], 1
    %16 = vsyncpa %s15, 0
    loop: start=0, step=1, limit=4
    $region2: #{mlp_forward.1} parent=1 // loop_pre_header
      _
    $region3: #{mlp_forward.1} parent=1 // loop_header
      %s18 = sphi 0, %s22
      %p19 = scmp.ge.s32.totalorder %s18, 4
      %s28 = sphi 0, %s30
      %s31 = sphi 0, %s28
      %s32 = sphi 0, %s31
      %s48 = sphi 0, %s32
      %s52 = sphi 0, %s52
      %s54 = sphi 0, %s52
      %s55 = sphi 0, %s54
      %s69 = sphi 0, %s55
      %s73 = sphi 0, %s73
      %s75 = sphi 0, %s73
      %s76 = sphi 0, %s75
      %s90 = sphi 0, %s76
      %s94 = sphi 0, %s94
      %s96 = sphi 0, %s94
      %s97 = sphi 0, %s96
      %s111 = sphi 0, %s97
      %s115 = sphi 0, %s115
      %s117 = sphi 0, %s115
      %s118 = sphi 0, %s117
      %s132 = sphi 0, %s118
      %s136 = sphi 0, %s136
      %s138 = sphi 0, %s136
      %s139 = sphi 0, %s138
      %s153 = sphi 0, %s139
      %s157 = sphi 0, %s157
      %s159 = sphi 0, %s157
      %s160 = sphi 0, %s159
      %s174 = sphi 0, %s160
      %s180 = sphi 0, %s182
      %s183 = sphi 0, %s180
      %s184 = sphi 0, %s183
      %s200 = sphi 0, %s184
    $region4: #{mlp_forward.1} parent=1 // loop_header_branch
      %21 = sbr.rel (%p19) target = $region8
    $region5: #{mlp_forward.1} parent=1 // loop_body
      %s23 = ssub.s32 %s18, 1
      %s24 = ssub.s32 %s18, 2
      %s25 = sadd.s32 %s18, 1
      %s26 = ssub.s32 %s18, %s25
      %p27 = scmp.eq.s32.totalorder %s26, 0
      %s29 = sadd.s32 %s28, 1
      %s30 = scalar_select %p27, %s28, %s29
      %p33 = pneg %p27
      %p34 = scmp.eq.s32.totalorder %s18, 1
      %p35 = por %p33, %p34
      %p36 = scmp.ne.s32.totalorder %s28, %s31
      %p37 = scmp.eq.s32.totalorder %s18, 0
      %p38 = por %p36, %p37
      %p39 = scmp.ne.s32.totalorder %s28, %s31
      %p40 = scmp.eq.s32.totalorder %s23, 1
      %p41 = por %p39, %p40
      %p42 = scmp.ne.s32.totalorder %s31, %s32
      %p43 = scmp.eq.s32.totalorder %s23, 0
      %p44 = por %p42, %p43
      %p45 = scmp.ne.s32.totalorder %s31, %s32
      %p46 = scmp.eq.s32.totalorder %s24, 1
      %p47 = por %p45, %p46
      %p49 = scmp.ne.s32.totalorder %s32, %s48
      %p50 = scmp.eq.s32.totalorder %s24, 0
      %p51 = por %p49, %p50
      %s53 = sadd.s32 %s52, 1
      %p56 = scmp.eq.s32.totalorder %s18, 1
      %p57 = scmp.ne.s32.totalorder %s52, %s54
      %p58 = scmp.eq.s32.totalorder %s18, 0
      %p59 = por %p57, %p58
      %p60 = scmp.ne.s32.totalorder %s52, %s54
      %p61 = scmp.eq.s32.totalorder %s23, 1
      %p62 = por %p60, %p61
      %p63 = scmp.ne.s32.totalorder %s54, %s55
      %p64 = scmp.eq.s32.totalorder %s23, 0
      %p65 = por %p63, %p64
      %p66 = scmp.ne.s32.totalorder %s54, %s55
      %p67 = scmp.eq.s32.totalorder %s24, 1
      %p68 = por %p66, %p67
      %p70 = scmp.ne.s32.totalorder %s55, %s69
      %p71 = scmp.eq.s32.totalorder %s24, 0
      %p72 = por %p70, %p71
      %s74 = sadd.s32 %s73, 1
      %p77 = scmp.eq.s32.totalorder %s18, 1
      %p78 = scmp.ne.s32.totalorder %s73, %s75
      %p79 = scmp.eq.s32.totalorder %s18, 0
      %p80 = por %p78, %p79
      %p81 = scmp.ne.s32.totalorder %s73, %s75
      %p82 = scmp.eq.s32.totalorder %s23, 1
      %p83 = por %p81, %p82
      %p84 = scmp.ne.s32.totalorder %s75, %s76
      %p85 = scmp.eq.s32.totalorder %s23, 0
      %p86 = por %p84, %p85
      %p87 = scmp.ne.s32.totalorder %s75, %s76
      %p88 = scmp.eq.s32.totalorder %s24, 1
      %p89 = por %p87, %p88
      %p91 = scmp.ne.s32.totalorder %s76, %s90
      %p92 = scmp.eq.s32.totalorder %s24, 0
      %p93 = por %p91, %p92
      %s95 = sadd.s32 %s94, 1
      %p98 = scmp.eq.s32.totalorder %s18, 1
      %p99 = scmp.ne.s32.totalorder %s94, %s96
      %p100 = scmp.eq.s32.totalorder %s18, 0
      %p101 = por %p99, %p100
      %p102 = scmp.ne.s32.totalorder %s94, %s96
      %p103 = scmp.eq.s32.totalorder %s23, 1
      %p104 = por %p102, %p103
      %p105 = scmp.ne.s32.totalorder %s96, %s97
      %p106 = scmp.eq.s32.totalorder %s23, 0
      %p107 = por %p105, %p106
      %p108 = scmp.ne.s32.totalorder %s96, %s97
      %p109 = scmp.eq.s32.totalorder %s24, 1
      %p110 = por %p108, %p109
      %p112 = scmp.ne.s32.totalorder %s97, %s111
      %p113 = scmp.eq.s32.totalorder %s24, 0
      %p114 = por %p112, %p113
      %s116 = sadd.s32 %s115, 1
      %p119 = scmp.eq.s32.totalorder %s18, 1
      %p120 = scmp.ne.s32.totalorder %s115, %s117
      %p121 = scmp.eq.s32.totalorder %s18, 0
      %p122 = por %p120, %p121
      %p123 = scmp.ne.s32.totalorder %s115, %s117
      %p124 = scmp.eq.s32.totalorder %s23, 1
      %p125 = por %p123, %p124
      %p126 = scmp.ne.s32.totalorder %s117, %s118
      %p127 = scmp.eq.s32.totalorder %s23, 0
      %p128 = por %p126, %p127
      %p129 = scmp.ne.s32.totalorder %s117, %s118
      %p130 = scmp.eq.s32.totalorder %s24, 1
      %p131 = por %p129, %p130
      %p133 = scmp.ne.s32.totalorder %s118, %s132
      %p134 = scmp.eq.s32.totalorder %s24, 0
      %p135 = por %p133, %p134
      %s137 = sadd.s32 %s136, 1
      %p140 = scmp.eq.s32.totalorder %s18, 1
      %p141 = scmp.ne.s32.totalorder %s136, %s138
      %p142 = scmp.eq.s32.totalorder %s18, 0
      %p143 = por %p141, %p142
      %p144 = scmp.ne.s32.totalorder %s136, %s138
      %p145 = scmp.eq.s32.totalorder %s23, 1
      %p146 = por %p144, %p145
      %p147 = scmp.ne.s32.totalorder %s138, %s139
      %p148 = scmp.eq.s32.totalorder %s23, 0
      %p149 = por %p147, %p148
      %p150 = scmp.ne.s32.totalorder %s138, %s139
      %p151 = scmp.eq.s32.totalorder %s24, 1
      %p152 = por %p150, %p151
      %p154 = scmp.ne.s32.totalorder %s139, %s153
      %p155 = scmp.eq.s32.totalorder %s24, 0
      %p156 = por %p154, %p155
      %s158 = sadd.s32 %s157, 1
      %p161 = scmp.eq.s32.totalorder %s18, 1
      %p162 = scmp.ne.s32.totalorder %s157, %s159
      %p163 = scmp.eq.s32.totalorder %s18, 0
      %p164 = por %p162, %p163
      %p165 = scmp.ne.s32.totalorder %s157, %s159
      %p166 = scmp.eq.s32.totalorder %s23, 1
      %p167 = por %p165, %p166
      %p168 = scmp.ne.s32.totalorder %s159, %s160
      %p169 = scmp.eq.s32.totalorder %s23, 0
      %p170 = por %p168, %p169
      %p171 = scmp.ne.s32.totalorder %s159, %s160
      %p172 = scmp.eq.s32.totalorder %s24, 1
      %p173 = por %p171, %p172
      %p175 = scmp.ne.s32.totalorder %s160, %s174
      %p176 = scmp.eq.s32.totalorder %s24, 0
      %p177 = por %p175, %p176
      %s178 = ssub.s32 %s18, %s25
      %p179 = scmp.eq.s32.totalorder %s178, 0
      %s181 = sadd.s32 %s180, 1
      %s182 = scalar_select %p179, %s180, %s181
      %p185 = pneg %p179
      %p186 = scmp.eq.s32.totalorder %s18, 1
      %p187 = por %p185, %p186
      %p188 = scmp.ne.s32.totalorder %s180, %s183
      %p189 = scmp.eq.s32.totalorder %s18, 0
      %p190 = por %p188, %p189
      %p191 = scmp.ne.s32.totalorder %s180, %s183
      %p192 = scmp.eq.s32.totalorder %s23, 1
      %p193 = por %p191, %p192
      %p194 = scmp.ne.s32.totalorder %s183, %s184
      %p195 = scmp.eq.s32.totalorder %s23, 0
      %p196 = por %p194, %p195
      %p197 = scmp.ne.s32.totalorder %s183, %s184
      %p198 = scmp.eq.s32.totalorder %s24, 1
      %p199 = por %p197, %p198
      %p201 = scmp.ne.s32.totalorder %s184, %s200
      %p202 = scmp.eq.s32.totalorder %s24, 0
      %p203 = por %p201, %p202
      %p204 = scmp.le.s32.totalorder 1, %s18
      %p205 = scmp.lt.s32.totalorder %s18, 3
      %p206 = pnand %p204, %p205
      %p207 = pneg %p206
      // Predicated region
      $region9: #{mlp_forward.1} parent=5 // pred_check
        _
      $region10: #{mlp_forward.1} parent=5 // pred_check_branch
        %209 = sbr.rel (%p206) target = $region12
      $region11: #{mlp_forward.1} parent=5 // pred_region
        %s210 = ssub.s32 %s18, 1
        // Predicated region
        $region13: #{mlp_forward.1} parent=11 // pred_check
          %p211 = pneg %p65
        $region14: #{mlp_forward.1} parent=11 // pred_check_branch
          %213 = sbr.rel (%p211) target = $region16
        $region15: #{mlp_forward.1} parent=11 // pred_region
          _
        $region16: #{mlp_forward.1} parent=11 // pred_fallthru
          _
        // Predicated region
        $region17: #{mlp_forward.1} parent=11 // pred_check
          %p214 = pneg %p86
        $region18: #{mlp_forward.1} parent=11 // pred_check_branch
          %216 = sbr.rel (%p214) target = $region20
        $region19: #{mlp_forward.1} parent=11 // pred_region
          _
        $region20: #{mlp_forward.1} parent=11 // pred_fallthru
          _
        // Predicated region
        $region21: #{mlp_forward.1} parent=11 // pred_check
          %p217 = pneg %p107
        $region22: #{mlp_forward.1} parent=11 // pred_check_branch
          %219 = sbr.rel (%p217) target = $region24
        $region23: #{mlp_forward.1} parent=11 // pred_region
          _
        $region24: #{mlp_forward.1} parent=11 // pred_fallthru
          _
        // Predicated region
        $region25: #{mlp_forward.1} parent=11 // pred_check
          %p220 = pneg %p128
        $region26: #{mlp_forward.1} parent=11 // pred_check_branch
          %222 = sbr.rel (%p220) target = $region28
        $region27: #{mlp_forward.1} parent=11 // pred_region
          _
        $region28: #{mlp_forward.1} parent=11 // pred_fallthru
          _
        // Predicated region
        $region29: #{mlp_forward.1} parent=11 // pred_check
          %p223 = pneg %p149
        $region30: #{mlp_forward.1} parent=11 // pred_check_branch
          %225 = sbr.rel (%p223) target = $region32
        $region31: #{mlp_forward.1} parent=11 // pred_region
          _
        $region32: #{mlp_forward.1} parent=11 // pred_fallthru
          _
        // Predicated region
        $region33: #{mlp_forward.1} parent=11 // pred_check
          %p226 = pneg %p170
        $region34: #{mlp_forward.1} parent=11 // pred_check_branch
          %228 = sbr.rel (%p226) target = $region36
        $region35: #{mlp_forward.1} parent=11 // pred_region
          _
        $region36: #{mlp_forward.1} parent=11 // pred_fallthru
          _
      $region12: #{mlp_forward.1} parent=5 // pred_fallthru
        _
      %p229 = scmp.lt.s32.totalorder %s18, 2
      // Predicated region
      $region37: #{mlp_forward.1} parent=5 // pred_check
        %p230 = pneg %p229
      $region38: #{mlp_forward.1} parent=5 // pred_check_branch
        %232 = sbr.rel (%p230) target = $region40
      $region39: #{mlp_forward.1} parent=5 // pred_region
        // Predicated region
        $region41: #{mlp_forward.1} parent=39 // pred_check
          %p233 = pneg %p38
        $region42: #{mlp_forward.1} parent=39 // pred_check_branch
          %235 = sbr.rel (%p233) target = $region44
        $region43: #{mlp_forward.1} parent=39 // pred_region
          %s236 = smul.u32 64, %s18
          %p237 = scmp.lt.s32.totalorder %s236, 127
          %s238 = scalar_select %p237, %s236, 127
          %s239 = smul.addr %s238, 8
          %s240 = scalar_lea.vmem %s0, %s239
          %s241 = smul.u32 64, %s18
        $region44: #{mlp_forward.1} parent=39 // pred_fallthru
          _
      $region40: #{mlp_forward.1} parent=5 // pred_fallthru
        _
      %p242 = scmp.le.s32.totalorder 1, %s18
      %p243 = scmp.lt.s32.totalorder %s18, 3
      %p244 = pnand %p242, %p243
      %p245 = pneg %p244
      // Predicated region
      $region45: #{mlp_forward.1} parent=5 // pred_check
        _
      $region46: #{mlp_forward.1} parent=5 // pred_check_branch
        %247 = sbr.rel (%p244) target = $region48
      $region47: #{mlp_forward.1} parent=5 // pred_region
        %s248 = ssub.s32 %s18, 1
        %s249 = smul.u32 64, %s23
        %p250 = scmp.lt.s32.totalorder %s249, 127
        %s251 = scalar_select %p250, %s249, 127
        %s252 = smul.addr %s251, 8
        %s253 = scalar_lea.vmem %s0, %s252
        %p254 = pneg %p44
        %p255 = pneg %p41
        %p256 = pneg %p65
        %p257 = pneg %p62
        %p258 = pneg %p86
        %p259 = pneg %p83
        %p260 = pneg %p107
        %p261 = pneg %p104
        %p262 = pneg %p128
        %p263 = pneg %p125
        %p264 = pneg %p149
        %p265 = pneg %p146
        %p266 = pneg %p170
        %p267 = pneg %p167
        %p268 = pneg %p196
        %p269 = pneg %p193
        %s270 = sand.u32 %s183, 1
        %s271 = scalar_lea.sflag [#allocation4], %s270
        %s272 = sand.u32 %s183, 1
        %s273 = smul.addr %s272, 4
        %s274 = scalar_lea.vmem [#allocation3], %s273
        %s275 = smul.u32 64, %s23
        %p276 = scmp.lt.s32.totalorder %s275, 127
        %s277 = scalar_select %p276, %s275, 127
        %s278 = smul.addr %s277, 8
        %s279 = scalar_lea.vmem %s0, %s278
        %s280 = smul.u32 64, %s23
        %v281 = vld [vmem:[%s279] sm:$0xff]
        %v282 = vld [vmem:[%s279 + $0x8] sm:$0xff]
        %v283 = vld [vmem:[%s279 + $0x10] sm:$0xff]
        %v284 = vld [vmem:[%s279 + $0x18] sm:$0xff]
        %v285 = vld [vmem:[%s279 + $0x20] sm:$0xff]
        %v286 = vld [vmem:[%s279 + $0x28] sm:$0xff]
        %v287 = vld [vmem:[%s279 + $0x30] sm:$0xff]
        %v288 = vld [vmem:[%s279 + $0x38] sm:$0xff]
        %v289 = vld [vmem:[%s279 + $0x40] sm:$0xff]
        %v290 = vld [vmem:[%s279 + $0x48] sm:$0xff]
        %v291 = vld [vmem:[%s279 + $0x50] sm:$0xff]
        %v292 = vld [vmem:[%s279 + $0x58] sm:$0xff]
        %v293 = vld [vmem:[%s279 + $0x60] sm:$0xff]
        %v294 = vld [vmem:[%s279 + $0x68] sm:$0xff]
        %v295 = vld [vmem:[%s279 + $0x70] sm:$0xff]
        %v296 = vld [vmem:[%s279 + $0x78] sm:$0xff]
        %v297 = vld [vmem:[%s279 + $0x80] sm:$0xff]
        %v298 = vld [vmem:[%s279 + $0x88] sm:$0xff]
        %v299 = vld [vmem:[%s279 + $0x90] sm:$0xff]
        %v300 = vld [vmem:[%s279 + $0x98] sm:$0xff]
        %v301 = vld [vmem:[%s279 + $0xa0] sm:$0xff]
        %v302 = vld [vmem:[%s279 + $0xa8] sm:$0xff]
        %v303 = vld [vmem:[%s279 + $0xb0] sm:$0xff]
        %v304 = vld [vmem:[%s279 + $0xb8] sm:$0xff]
        %v305 = vld [vmem:[%s279 + $0xc0] sm:$0xff]
        %v306 = vld [vmem:[%s279 + $0xc8] sm:$0xff]
        %v307 = vld [vmem:[%s279 + $0xd0] sm:$0xff]
        %v308 = vld [vmem:[%s279 + $0xd8] sm:$0xff]
        %v309 = vld [vmem:[%s279 + $0xe0] sm:$0xff]
        %v310 = vld [vmem:[%s279 + $0xe8] sm:$0xff]
        %v311 = vld [vmem:[%s279 + $0xf0] sm:$0xff]
        %v312 = vld [vmem:[%s279 + $0xf8] sm:$0xff]
        %v313 = vld [vmem:[%s279 + $0x100] sm:$0xff]
        %v314 = vld [vmem:[%s279 + $0x108] sm:$0xff]
        %v315 = vld [vmem:[%s279 + $0x110] sm:$0xff]
        %v316 = vld [vmem:[%s279 + $0x118] sm:$0xff]
        %v317 = vld [vmem:[%s279 + $0x120] sm:$0xff]
        %v318 = vld [vmem:[%s279 + $0x128] sm:$0xff]
        %v319 = vld [vmem:[%s279 + $0x130] sm:$0xff]
        %v320 = vld [vmem:[%s279 + $0x138] sm:$0xff]
        %v321 = vld [vmem:[%s279 + $0x140] sm:$0xff]
        %v322 = vld [vmem:[%s279 + $0x148] sm:$0xff]
        %v323 = vld [vmem:[%s279 + $0x150] sm:$0xff]
        %v324 = vld [vmem:[%s279 + $0x158] sm:$0xff]
        %v325 = vld [vmem:[%s279 + $0x160] sm:$0xff]
        %v326 = vld [vmem:[%s279 + $0x168] sm:$0xff]
        %v327 = vld [vmem:[%s279 + $0x170] sm:$0xff]
        %v328 = vld [vmem:[%s279 + $0x178] sm:$0xff]
        %v329 = vld [vmem:[%s279 + $0x180] sm:$0xff]
        %v330 = vld [vmem:[%s279 + $0x188] sm:$0xff]
        %v331 = vld [vmem:[%s279 + $0x190] sm:$0xff]
        %v332 = vld [vmem:[%s279 + $0x198] sm:$0xff]
        %v333 = vld [vmem:[%s279 + $0x1a0] sm:$0xff]
        %v334 = vld [vmem:[%s279 + $0x1a8] sm:$0xff]
        %v335 = vld [vmem:[%s279 + $0x1b0] sm:$0xff]
        %v336 = vld [vmem:[%s279 + $0x1b8] sm:$0xff]
        %v337 = vld [vmem:[%s279 + $0x1c0] sm:$0xff]
        %v338 = vld [vmem:[%s279 + $0x1c8] sm:$0xff]
        %v339 = vld [vmem:[%s279 + $0x1d0] sm:$0xff]
        %v340 = vld [vmem:[%s279 + $0x1d8] sm:$0xff]
        %v341 = vld [vmem:[%s279 + $0x1e0] sm:$0xff]
        %v342 = vld [vmem:[%s279 + $0x1e8] sm:$0xff]
        %v343 = vld [vmem:[%s279 + $0x1f0] sm:$0xff]
        %v344 = vld [vmem:[%s279 + $0x1f8] sm:$0xff]
        %v345 = vld [vmem:[%s1] sm:$0xff]
        %v346 = vld [vmem:[%s1 + $0x8] sm:$0xff]
        %v347 = vld [vmem:[%s1 + $0x10] sm:$0xff]
        %v348 = vld [vmem:[%s2] sm:$0x1]
        %v350 = vlaneseq
        %v351 = vshrl.u32 %v350, 7
        %v352 = vsub.s32 0, %v351
        %v353 = vrot.slane %v348, %v352
        %vm355 = vcmask 195584
        %v357 = vsel %vm355, %v281, 0
        %v360 = vsel %vm355, %v282, 0
        %v363 = vsel %vm355, %v283, 0
        %v366 = vsel %vm355, %v284, 0
        %v369 = vsel %vm355, %v285, 0
        %v372 = vsel %vm355, %v286, 0
        %v375 = vsel %vm355, %v287, 0
        %v378 = vsel %vm355, %v288, 0
        %v381 = vsel %vm355, %v289, 0
        %v384 = vsel %vm355, %v290, 0
        %v387 = vsel %vm355, %v291, 0
        %v390 = vsel %vm355, %v292, 0
        %v393 = vsel %vm355, %v293, 0
        %v396 = vsel %vm355, %v294, 0
        %v399 = vsel %vm355, %v295, 0
        %v402 = vsel %vm355, %v296, 0
        %v405 = vsel %vm355, %v297, 0
        %v408 = vsel %vm355, %v298, 0
        %v411 = vsel %vm355, %v299, 0
        %v414 = vsel %vm355, %v300, 0
        %v417 = vsel %vm355, %v301, 0
        %v420 = vsel %vm355, %v302, 0
        %v423 = vsel %vm355, %v303, 0
        %v426 = vsel %vm355, %v304, 0
        %v429 = vsel %vm355, %v305, 0
        %v432 = vsel %vm355, %v306, 0
        %v435 = vsel %vm355, %v307, 0
        %v438 = vsel %vm355, %v308, 0
        %v441 = vsel %vm355, %v309, 0
        %v444 = vsel %vm355, %v310, 0
        %v447 = vsel %vm355, %v311, 0
        %v450 = vsel %vm355, %v312, 0
        %v453 = vsel %vm355, %v313, 0
        %v456 = vsel %vm355, %v314, 0
        %v459 = vsel %vm355, %v315, 0
        %v462 = vsel %vm355, %v316, 0
        %v465 = vsel %vm355, %v317, 0
        %v468 = vsel %vm355, %v318, 0
        %v471 = vsel %vm355, %v319, 0
        %v474 = vsel %vm355, %v320, 0
        %v477 = vsel %vm355, %v321, 0
        %v480 = vsel %vm355, %v322, 0
        %v483 = vsel %vm355, %v323, 0
        %v486 = vsel %vm355, %v324, 0
        %v489 = vsel %vm355, %v325, 0
        %v492 = vsel %vm355, %v326, 0
        %v495 = vsel %vm355, %v327, 0
        %v498 = vsel %vm355, %v328, 0
        %v501 = vsel %vm355, %v329, 0
        %v504 = vsel %vm355, %v330, 0
        %v507 = vsel %vm355, %v331, 0
        %v510 = vsel %vm355, %v332, 0
        %v513 = vsel %vm355, %v333, 0
        %v516 = vsel %vm355, %v334, 0
        %v519 = vsel %vm355, %v335, 0
        %v522 = vsel %vm355, %v336, 0
        %v525 = vsel %vm355, %v337, 0
        %v528 = vsel %vm355, %v338, 0
        %v531 = vsel %vm355, %v339, 0
        %v534 = vsel %vm355, %v340, 0
        %v537 = vsel %vm355, %v341, 0
        %v540 = vsel %vm355, %v342, 0
        %v543 = vsel %vm355, %v343, 0
        %v546 = vsel %vm355, %v344, 0
        %548 = vmatprep.subr.mxu0 0.0
        %549 = vmatpush1.msra.mxu0 %v345
        %550 = vmatprep.subr.mxu0 0.0
        %551 = vmatpush1.msra.mxu0 %v346
        %552 = vmatprep.subr.mxu0 0.0
        %553 = vmatpush1.msra.mxu0 %v347
        %554 = vmatprep.subr.mxu0 0.0
        %555 = vmatpush1.msra.mxu0 0.0
        %556 = vmatprep.subr.mxu0 0.0
        %557 = vmatpush1.msra.mxu0 0.0
        %558 = vmatprep.subr.mxu0 0.0
        %559 = vmatpush1.msra.mxu0 0.0
        %560 = vmatprep.subr.mxu0 0.0
        %561 = vmatpush1.msra.mxu0 0.0
        %562 = vmatprep.subr.mxu0 0.0
        %563 = vmatpush1.msra.mxu0 0.0
        %564 = vmatprep.subr.mxu0 0.0
        %565 = vmatpush1.msra.mxu0 0.0
        %566 = vmatprep.subr.mxu0 0.0
        %567 = vmatpush1.msra.mxu0 0.0
        %568 = vmatprep.subr.mxu0 0.0
        %569 = vmatpush1.msra.mxu0 0.0
        %570 = vmatprep.subr.mxu0 0.0
        %571 = vmatpush1.msra.mxu0 0.0
        %572 = vmatprep.subr.mxu0 0.0
        %573 = vmatpush1.msra.mxu0 0.0
        %574 = vmatprep.subr.mxu0 0.0
        %575 = vmatpush1.msra.mxu0 0.0
        %576 = vmatprep.subr.mxu0 0.0
        %577 = vmatpush1.msra.mxu0 0.0
        %578 = vmatprep.subr.mxu0 0.0
        %579 = vmatpush1.msra.mxu0 0.0
        %580 = vmatprep.subr.mxu0 0.0
        %581 = vmatpush1.msra.mxu0 0.0
        %582 = vmatprep.subr.mxu0 0.0
        %583 = vmatpush1.msra.mxu0 0.0
        %584 = vmatprep.subr.mxu0 0.0
        %585 = vmatpush1.msra.mxu0 0.0
        %586 = vmatprep.subr.mxu0 0.0
        %587 = vmatpush1.msra.mxu0 0.0
        %588 = vmatprep.subr.mxu0 0.0
        %589 = vmatpush1.msra.mxu0 0.0
        %590 = vmatprep.subr.mxu0 0.0
        %591 = vmatpush1.msra.mxu0 0.0
        %592 = vmatprep.subr.mxu0 0.0
        %593 = vmatpush1.msra.mxu0 0.0
        %594 = vmatprep.subr.mxu0 0.0
        %595 = vmatpush1.msra.mxu0 0.0
        %596 = vmatprep.subr.mxu0 0.0
        %597 = vmatpush1.msra.mxu0 0.0
        %598 = vmatprep.subr.mxu0 0.0
        %599 = vmatpush1.msra.mxu0 0.0
        %600 = vmatprep.subr.mxu0 0.0
        %601 = vmatpush1.msra.mxu0 0.0
        %602 = vmatprep.subr.mxu0 0.0
        %603 = vmatpush1.msra.mxu0 0.0
        %604 = vmatprep.subr.mxu0 0.0
        %605 = vmatpush1.msra.mxu0 0.0
        %606 = vmatprep.subr.mxu0 0.0
        %607 = vmatpush1.msra.mxu0 0.0
        %608 = vmatprep.subr.mxu0 0.0
        %609 = vmatpush1.msra.mxu0 0.0
        %610 = vmatprep.subr.mxu0 0.0
        %611 = vmatpush1.msra.mxu0 0.0
        %612 = vmatprep.mubr.f32.mxu0 0.0
        %613 = vmatmul.mubr.f32.gmra.mrb[0].mxu0 %v357
        %v614 = vpop.f32.mrb[0].mxu0
        %v615 = vadd.f32 %v353, %v614
        %v616 = vpop.f32.mrb[0].mxu0
        %617 = vmatprep.mubr.f32.mxu0 0.0
        %618 = vmatmul.mubr.f32.gmra.mrb[0].mxu0 %v360
        %v619 = vpop.f32.mrb[0].mxu0
        %v620 = vadd.f32 %v353, %v619
        %v621 = vpop.f32.mrb[0].mxu0
        %622 = vmatprep.mubr.f32.mxu0 0.0
        %623 = vmatmul.mubr.f32.gmra.mrb[0].mxu0 %v363
        %v624 = vpop.f32.mrb[0].mxu0
        %v625 = vadd.f32 %v353, %v624
        %v626 = vpop.f32.mrb[0].mxu0
        %627 = vmatprep.mubr.f32.mxu0 0.0
        %628 = vmatmul.mubr.f32.gmra.mrb[0].mxu0 %v366
        %v629 = vpop.f32.mrb[0].mxu0
        %v630 = vadd.f32 %v353, %v629
        %v631 = vpop.f32.mrb[0].mxu0
        %632 = vmatprep.mubr.f32.mxu0 0.0
        %633 = vmatmul.mubr.f32.gmra.mrb[0].mxu0 %v369
        %v634 = vpop.f32.mrb[0].mxu0
        %v635 = vadd.f32 %v353, %v634
        %v636 = vpop.f32.mrb[0].mxu0
        %637 = vmatprep.mubr.f32.mxu0 0.0
        %638 = vmatmul.mubr.f32.gmra.mrb[0].mxu0 %v372
        %v639 = vpop.f32.mrb[0].mxu0
        %v640 = vadd.f32 %v353, %v639
        %v641 = vpop.f32.mrb[0].mxu0
        %642 = vmatprep.mubr.f32.mxu0 0.0
        %643 = vmatmul.mubr.f32.gmra.mrb[0].mxu0 %v375
        %v644 = vpop.f32.mrb[0].mxu0
        %v645 = vadd.f32 %v353, %v644
        %v646 = vpop.f32.mrb[0].mxu0
        %647 = vmatprep.mubr.f32.mxu0 0.0
        %648 = vmatmul.mubr.f32.gmra.mrb[0].mxu0 %v378
        %v649 = vpop.f32.mrb[0].mxu0
        %v650 = vadd.f32 %v353, %v649
        %v651 = vpop.f32.mrb[0].mxu0
        %652 = vmatprep.mubr.f32.mxu0 0.0
        %653 = vmatmul.mubr.f32.gmra.mrb[0].mxu0 %v381
        %v654 = vpop.f32.mrb[0].mxu0
        %v655 = vadd.f32 %v353, %v654
        %v656 = vpop.f32.mrb[0].mxu0
        %657 = vmatprep.mubr.f32.mxu0 0.0
        %658 = vmatmul.mubr.f32.gmra.mrb[0].mxu0 %v384
        %v659 = vpop.f32.mrb[0].mxu0
        %v660 = vadd.f32 %v353, %v659
        %v661 = vpop.f32.mrb[0].mxu0
        %662 = vmatprep.mubr.f32.mxu0 0.0
        %663 = vmatmul.mubr.f32.gmra.mrb[0].mxu0 %v387
        %v664 = vpop.f32.mrb[0].mxu0
        %v665 = vadd.f32 %v353, %v664
        %v666 = vpop.f32.mrb[0].mxu0
        %667 = vmatprep.mubr.f32.mxu0 0.0
        %668 = vmatmul.mubr.f32.gmra.mrb[0].mxu0 %v390
        %v669 = vpop.f32.mrb[0].mxu0
        %v670 = vadd.f32 %v353, %v669
        %v671 = vpop.f32.mrb[0].mxu0
        %672 = vmatprep.mubr.f32.mxu0 0.0
        %673 = vmatmul.mubr.f32.gmra.mrb[0].mxu0 %v393
        %v674 = vpop.f32.mrb[0].mxu0
        %v675 = vadd.f32 %v353, %v674
        %v676 = vpop.f32.mrb[0].mxu0
        %677 = vmatprep.mubr.f32.mxu0 0.0
        %678 = vmatmul.mubr.f32.gmra.mrb[0].mxu0 %v396
        %v679 = vpop.f32.mrb[0].mxu0
        %v680 = vadd.f32 %v353, %v679
        %v681 = vpop.f32.mrb[0].mxu0
        %682 = vmatprep.mubr.f32.mxu0 0.0
        %683 = vmatmul.mubr.f32.gmra.mrb[0].mxu0 %v399
        %v684 = vpop.f32.mrb[0].mxu0
        %v685 = vadd.f32 %v353, %v684
        %v686 = vpop.f32.mrb[0].mxu0
        %687 = vmatprep.mubr.f32.mxu0 0.0
        %688 = vmatmul.mubr.f32.gmra.mrb[0].mxu0 %v402
        %v689 = vpop.f32.mrb[0].mxu0
        %v690 = vadd.f32 %v353, %v689
        %v691 = vpop.f32.mrb[0].mxu0
        %692 = vmatprep.mubr.f32.mxu0 0.0
        %693 = vmatmul.mubr.f32.gmra.mrb[0].mxu0 %v405
        %v694 = vpop.f32.mrb[0].mxu0
        %v695 = vadd.f32 %v353, %v694
        %v696 = vpop.f32.mrb[0].mxu0
        %697 = vmatprep.mubr.f32.mxu0 0.0
        %698 = vmatmul.mubr.f32.gmra.mrb[0].mxu0 %v408
        %v699 = vpop.f32.mrb[0].mxu0
        %v700 = vadd.f32 %v353, %v699
        %v701 = vpop.f32.mrb[0].mxu0
        %702 = vmatprep.mubr.f32.mxu0 0.0
        %703 = vmatmul.mubr.f32.gmra.mrb[0].mxu0 %v411
        %v704 = vpop.f32.mrb[0].mxu0
        %v705 = vadd.f32 %v353, %v704
        %v706 = vpop.f32.mrb[0].mxu0
        %707 = vmatprep.mubr.f32.mxu0 0.0
        %708 = vmatmul.mubr.f32.gmra.mrb[0].mxu0 %v414
        %v709 = vpop.f32.mrb[0].mxu0
        %v710 = vadd.f32 %v353, %v709
        %v711 = vpop.f32.mrb[0].mxu0
        %712 = vmatprep.mubr.f32.mxu0 0.0
        %713 = vmatmul.mubr.f32.gmra.mrb[0].mxu0 %v417
        %v714 = vpop.f32.mrb[0].mxu0
        %v715 = vadd.f32 %v353, %v714
        %v716 = vpop.f32.mrb[0].mxu0
        %717 = vmatprep.mubr.f32.mxu0 0.0
        %718 = vmatmul.mubr.f32.gmra.mrb[0].mxu0 %v420
        %v719 = vpop.f32.mrb[0].mxu0
        %v720 = vadd.f32 %v353, %v719
        %v721 = vpop.f32.mrb[0].mxu0
        %722 = vmatprep.mubr.f32.mxu0 0.0
        %723 = vmatmul.mubr.f32.gmra.mrb[0].mxu0 %v423
        %v724 = vpop.f32.mrb[0].mxu0
        %v725 = vadd.f32 %v353, %v724
        %v726 = vpop.f32.mrb[0].mxu0
        %727 = vmatprep.mubr.f32.mxu0 0.0
        %728 = vmatmul.mubr.f32.gmra.mrb[0].mxu0 %v426
        %v729 = vpop.f32.mrb[0].mxu0
        %v730 = vadd.f32 %v353, %v729
        %v731 = vpop.f32.mrb[0].mxu0
        %732 = vmatprep.mubr.f32.mxu0 0.0
        %733 = vmatmul.mubr.f32.gmra.mrb[0].mxu0 %v429
        %v734 = vpop.f32.mrb[0].mxu0
        %v735 = vadd.f32 %v353, %v734
        %v736 = vpop.f32.mrb[0].mxu0
        %737 = vmatprep.mubr.f32.mxu0 0.0
        %738 = vmatmul.mubr.f32.gmra.mrb[0].mxu0 %v432
        %v739 = vpop.f32.mrb[0].mxu0
        %v740 = vadd.f32 %v353, %v739
        %v741 = vpop.f32.mrb[0].mxu0
        %742 = vmatprep.mubr.f32.mxu0 0.0
        %743 = vmatmul.mubr.f32.gmra.mrb[0].mxu0 %v435
        %v744 = vpop.f32.mrb[0].mxu0
        %v745 = vadd.f32 %v353, %v744
        %v746 = vpop.f32.mrb[0].mxu0
        %747 = vmatprep.mubr.f32.mxu0 0.0
        %748 = vmatmul.mubr.f32.gmra.mrb[0].mxu0 %v438
        %v749 = vpop.f32.mrb[0].mxu0
        %v750 = vadd.f32 %v353, %v749
        %v751 = vpop.f32.mrb[0].mxu0
        %752 = vmatprep.mubr.f32.mxu0 0.0
        %753 = vmatmul.mubr.f32.gmra.mrb[0].mxu0 %v441
        %v754 = vpop.f32.mrb[0].mxu0
        %v755 = vadd.f32 %v353, %v754
        %v756 = vpop.f32.mrb[0].mxu0
        %757 = vmatprep.mubr.f32.mxu0 0.0
        %758 = vmatmul.mubr.f32.gmra.mrb[0].mxu0 %v444
        %v759 = vpop.f32.mrb[0].mxu0
        %v760 = vadd.f32 %v353, %v759
        %v761 = vpop.f32.mrb[0].mxu0
        %762 = vmatprep.mubr.f32.mxu0 0.0
        %763 = vmatmul.mubr.f32.gmra.mrb[0].mxu0 %v447
        %v764 = vpop.f32.mrb[0].mxu0
        %v765 = vadd.f32 %v353, %v764
        %v766 = vpop.f32.mrb[0].mxu0
        %767 = vmatprep.mubr.f32.mxu0 0.0
        %768 = vmatmul.mubr.f32.gmra.mrb[0].mxu0 %v450
        %v769 = vpop.f32.mrb[0].mxu0
        %v770 = vadd.f32 %v353, %v769
        %v771 = vpop.f32.mrb[0].mxu0
        %772 = vmatprep.mubr.f32.mxu0 0.0
        %773 = vmatmul.mubr.f32.gmra.mrb[0].mxu0 %v453
        %v774 = vpop.f32.mrb[0].mxu0
        %v775 = vadd.f32 %v353, %v774
        %v776 = vpop.f32.mrb[0].mxu0
        %777 = vmatprep.mubr.f32.mxu0 0.0
        %778 = vmatmul.mubr.f32.gmra.mrb[0].mxu0 %v456
        %v779 = vpop.f32.mrb[0].mxu0
        %v780 = vadd.f32 %v353, %v779
        %v781 = vpop.f32.mrb[0].mxu0
        %782 = vmatprep.mubr.f32.mxu0 0.0
        %783 = vmatmul.mubr.f32.gmra.mrb[0].mxu0 %v459
        %v784 = vpop.f32.mrb[0].mxu0
        %v785 = vadd.f32 %v353, %v784
        %v786 = vpop.f32.mrb[0].mxu0
        %787 = vmatprep.mubr.f32.mxu0 0.0
        %788 = vmatmul.mubr.f32.gmra.mrb[0].mxu0 %v462
        %v789 = vpop.f32.mrb[0].mxu0
        %v790 = vadd.f32 %v353, %v789
        %v791 = vpop.f32.mrb[0].mxu0
        %792 = vmatprep.mubr.f32.mxu0 0.0
        %793 = vmatmul.mubr.f32.gmra.mrb[0].mxu0 %v465
        %v794 = vpop.f32.mrb[0].mxu0
        %v795 = vadd.f32 %v353, %v794
        %v796 = vpop.f32.mrb[0].mxu0
        %797 = vmatprep.mubr.f32.mxu0 0.0
        %798 = vmatmul.mubr.f32.gmra.mrb[0].mxu0 %v468
        %v799 = vpop.f32.mrb[0].mxu0
        %v800 = vadd.f32 %v353, %v799
        %v801 = vpop.f32.mrb[0].mxu0
        %802 = vmatprep.mubr.f32.mxu0 0.0
        %803 = vmatmul.mubr.f32.gmra.mrb[0].mxu0 %v471
        %v804 = vpop.f32.mrb[0].mxu0
        %v805 = vadd.f32 %v353, %v804
        %v806 = vpop.f32.mrb[0].mxu0
        %807 = vmatprep.mubr.f32.mxu0 0.0
        %808 = vmatmul.mubr.f32.gmra.mrb[0].mxu0 %v474
        %v809 = vpop.f32.mrb[0].mxu0
        %v810 = vadd.f32 %v353, %v809
        %v811 = vpop.f32.mrb[0].mxu0
        %812 = vmatprep.mubr.f32.mxu0 0.0
        %813 = vmatmul.mubr.f32.gmra.mrb[0].mxu0 %v477
        %v814 = vpop.f32.mrb[0].mxu0
        %v815 = vadd.f32 %v353, %v814
        %v816 = vpop.f32.mrb[0].mxu0
        %817 = vmatprep.mubr.f32.mxu0 0.0
        %818 = vmatmul.mubr.f32.gmra.mrb[0].mxu0 %v480
        %v819 = vpop.f32.mrb[0].mxu0
        %v820 = vadd.f32 %v353, %v819
        %v821 = vpop.f32.mrb[0].mxu0
        %822 = vmatprep.mubr.f32.mxu0 0.0
        %823 = vmatmul.mubr.f32.gmra.mrb[0].mxu0 %v483
        %v824 = vpop.f32.mrb[0].mxu0
        %v825 = vadd.f32 %v353, %v824
        %v826 = vpop.f32.mrb[0].mxu0
        %827 = vmatprep.mubr.f32.mxu0 0.0
        %828 = vmatmul.mubr.f32.gmra.mrb[0].mxu0 %v486
        %v829 = vpop.f32.mrb[0].mxu0
        %v830 = vadd.f32 %v353, %v829
        %v831 = vpop.f32.mrb[0].mxu0
        %832 = vmatprep.mubr.f32.mxu0 0.0
        %833 = vmatmul.mubr.f32.gmra.mrb[0].mxu0 %v489
        %v834 = vpop.f32.mrb[0].mxu0
        %v835 = vadd.f32 %v353, %v834
        %v836 = vpop.f32.mrb[0].mxu0
        %837 = vmatprep.mubr.f32.mxu0 0.0
        %838 = vmatmul.mubr.f32.gmra.mrb[0].mxu0 %v492
        %v839 = vpop.f32.mrb[0].mxu0
        %v840 = vadd.f32 %v353, %v839
        %v841 = vpop.f32.mrb[0].mxu0
        %842 = vmatprep.mubr.f32.mxu0 0.0
        %843 = vmatmul.mubr.f32.gmra.mrb[0].mxu0 %v495
        %v844 = vpop.f32.mrb[0].mxu0
        %v845 = vadd.f32 %v353, %v844
        %v846 = vpop.f32.mrb[0].mxu0
        %847 = vmatprep.mubr.f32.mxu0 0.0
        %848 = vmatmul.mubr.f32.gmra.mrb[0].mxu0 %v498
        %v849 = vpop.f32.mrb[0].mxu0
        %v850 = vadd.f32 %v353, %v849
        %v851 = vpop.f32.mrb[0].mxu0
        %852 = vmatprep.mubr.f32.mxu0 0.0
        %853 = vmatmul.mubr.f32.gmra.mrb[0].mxu0 %v501
        %v854 = vpop.f32.mrb[0].mxu0
        %v855 = vadd.f32 %v353, %v854
        %v856 = vpop.f32.mrb[0].mxu0
        %857 = vmatprep.mubr.f32.mxu0 0.0
        %858 = vmatmul.mubr.f32.gmra.mrb[0].mxu0 %v504
        %v859 = vpop.f32.mrb[0].mxu0
        %v860 = vadd.f32 %v353, %v859
        %v861 = vpop.f32.mrb[0].mxu0
        %862 = vmatprep.mubr.f32.mxu0 0.0
        %863 = vmatmul.mubr.f32.gmra.mrb[0].mxu0 %v507
        %v864 = vpop.f32.mrb[0].mxu0
        %v865 = vadd.f32 %v353, %v864
        %v866 = vpop.f32.mrb[0].mxu0
        %867 = vmatprep.mubr.f32.mxu0 0.0
        %868 = vmatmul.mubr.f32.gmra.mrb[0].mxu0 %v510
        %v869 = vpop.f32.mrb[0].mxu0
        %v870 = vadd.f32 %v353, %v869
        %v871 = vpop.f32.mrb[0].mxu0
        %872 = vmatprep.mubr.f32.mxu0 0.0
        %873 = vmatmul.mubr.f32.gmra.mrb[0].mxu0 %v513
        %v874 = vpop.f32.mrb[0].mxu0
        %v875 = vadd.f32 %v353, %v874
        %v876 = vpop.f32.mrb[0].mxu0
        %877 = vmatprep.mubr.f32.mxu0 0.0
        %878 = vmatmul.mubr.f32.gmra.mrb[0].mxu0 %v516
        %v879 = vpop.f32.mrb[0].mxu0
        %v880 = vadd.f32 %v353, %v879
        %v881 = vpop.f32.mrb[0].mxu0
        %882 = vmatprep.mubr.f32.mxu0 0.0
        %883 = vmatmul.mubr.f32.gmra.mrb[0].mxu0 %v519
        %v884 = vpop.f32.mrb[0].mxu0
        %v885 = vadd.f32 %v353, %v884
        %v886 = vpop.f32.mrb[0].mxu0
        %887 = vmatprep.mubr.f32.mxu0 0.0
        %888 = vmatmul.mubr.f32.gmra.mrb[0].mxu0 %v522
        %v889 = vpop.f32.mrb[0].mxu0
        %v890 = vadd.f32 %v353, %v889
        %v891 = vpop.f32.mrb[0].mxu0
        %892 = vmatprep.mubr.f32.mxu0 0.0
        %893 = vmatmul.mubr.f32.gmra.mrb[0].mxu0 %v525
        %v894 = vpop.f32.mrb[0].mxu0
        %v895 = vadd.f32 %v353, %v894
        %v896 = vpop.f32.mrb[0].mxu0
        %897 = vmatprep.mubr.f32.mxu0 0.0
        %898 = vmatmul.mubr.f32.gmra.mrb[0].mxu0 %v528
        %v899 = vpop.f32.mrb[0].mxu0
        %v900 = vadd.f32 %v353, %v899
        %v901 = vpop.f32.mrb[0].mxu0
        %902 = vmatprep.mubr.f32.mxu0 0.0
        %903 = vmatmul.mubr.f32.gmra.mrb[0].mxu0 %v531
        %v904 = vpop.f32.mrb[0].mxu0
        %v905 = vadd.f32 %v353, %v904
        %v906 = vpop.f32.mrb[0].mxu0
        %907 = vmatprep.mubr.f32.mxu0 0.0
        %908 = vmatmul.mubr.f32.gmra.mrb[0].mxu0 %v534
        %v909 = vpop.f32.mrb[0].mxu0
        %v910 = vadd.f32 %v353, %v909
        %v911 = vpop.f32.mrb[0].mxu0
        %912 = vmatprep.mubr.f32.mxu0 0.0
        %913 = vmatmul.mubr.f32.gmra.mrb[0].mxu0 %v537
        %v914 = vpop.f32.mrb[0].mxu0
        %v915 = vadd.f32 %v353, %v914
        %v916 = vpop.f32.mrb[0].mxu0
        %917 = vmatprep.mubr.f32.mxu0 0.0
        %918 = vmatmul.mubr.f32.gmra.mrb[0].mxu0 %v540
        %v919 = vpop.f32.mrb[0].mxu0
        %v920 = vadd.f32 %v353, %v919
        %v921 = vpop.f32.mrb[0].mxu0
        %922 = vmatprep.mubr.f32.mxu0 0.0
        %923 = vmatmul.mubr.f32.gmra.mrb[0].mxu0 %v543
        %v924 = vpop.f32.mrb[0].mxu0
        %v925 = vadd.f32 %v353, %v924
        %v926 = vpop.f32.mrb[0].mxu0
        %927 = vmatprep.mubr.f32.mxu0 0.0
        %928 = vmatmul.mubr.f32.gmra.mrb[0].mxu0 %v546
        %v929 = vpop.f32.mrb[0].mxu0
        %v930 = vadd.f32 %v353, %v929
        %v931 = vpop.f32.mrb[0].mxu0
        %932 = vdwg.mxu0
        %v933 = vmax.f32 %v615, 0.0
        %v934 = vmax.f32 %v620, 0.0
        %v935 = vmax.f32 %v625, 0.0
        %v936 = vmax.f32 %v630, 0.0
        %v937 = vmax.f32 %v635, 0.0
        %v938 = vmax.f32 %v640, 0.0
        %v939 = vmax.f32 %v645, 0.0
        %v940 = vmax.f32 %v650, 0.0
        %v941 = vmax.f32 %v655, 0.0
        %v942 = vmax.f32 %v660, 0.0
        %v943 = vmax.f32 %v665, 0.0
        %v944 = vmax.f32 %v670, 0.0
        %v945 = vmax.f32 %v675, 0.0
        %v946 = vmax.f32 %v680, 0.0
        %v947 = vmax.f32 %v685, 0.0
        %v948 = vmax.f32 %v690, 0.0
        %v949 = vmax.f32 %v695, 0.0
        %v950 = vmax.f32 %v700, 0.0
        %v951 = vmax.f32 %v705, 0.0
        %v952 = vmax.f32 %v710, 0.0
        %v953 = vmax.f32 %v715, 0.0
        %v954 = vmax.f32 %v720, 0.0
        %v955 = vmax.f32 %v725, 0.0
        %v956 = vmax.f32 %v730, 0.0
        %v957 = vmax.f32 %v735, 0.0
        %v958 = vmax.f32 %v740, 0.0
        %v959 = vmax.f32 %v745, 0.0
        %v960 = vmax.f32 %v750, 0.0
        %v961 = vmax.f32 %v755, 0.0
        %v962 = vmax.f32 %v760, 0.0
        %v963 = vmax.f32 %v765, 0.0
        %v964 = vmax.f32 %v770, 0.0
        %v965 = vmax.f32 %v775, 0.0
        %v966 = vmax.f32 %v780, 0.0
        %v967 = vmax.f32 %v785, 0.0
        %v968 = vmax.f32 %v790, 0.0
        %v969 = vmax.f32 %v795, 0.0
        %v970 = vmax.f32 %v800, 0.0
        %v971 = vmax.f32 %v805, 0.0
        %v972 = vmax.f32 %v810, 0.0
        %v973 = vmax.f32 %v815, 0.0
        %v974 = vmax.f32 %v820, 0.0
        %v975 = vmax.f32 %v825, 0.0
        %v976 = vmax.f32 %v830, 0.0
        %v977 = vmax.f32 %v835, 0.0
        %v978 = vmax.f32 %v840, 0.0
        %v979 = vmax.f32 %v845, 0.0
        %v980 = vmax.f32 %v850, 0.0
        %v981 = vmax.f32 %v855, 0.0
        %v982 = vmax.f32 %v860, 0.0
        %v983 = vmax.f32 %v865, 0.0
        %v984 = vmax.f32 %v870, 0.0
        %v985 = vmax.f32 %v875, 0.0
        %v986 = vmax.f32 %v880, 0.0
        %v987 = vmax.f32 %v885, 0.0
        %v988 = vmax.f32 %v890, 0.0
        %v989 = vmax.f32 %v895, 0.0
        %v990 = vmax.f32 %v900, 0.0
        %v991 = vmax.f32 %v905, 0.0
        %v992 = vmax.f32 %v910, 0.0
        %v993 = vmax.f32 %v915, 0.0
        %v994 = vmax.f32 %v920, 0.0
        %v995 = vmax.f32 %v925, 0.0
        %v996 = vmax.f32 %v930, 0.0
        %v997 = vld [vmem:[%s3] sm:$0xff]
        %v998 = vld [vmem:[%s3 + $0x8] sm:$0xff]
        %v999 = vld [vmem:[%s3 + $0x10] sm:$0xff]
        %v1000 = vld [vmem:[%s3 + $0x18] sm:$0xff]
        %v1001 = vld [vmem:[%s3 + $0x20] sm:$0xff]
        %v1002 = vld [vmem:[%s3 + $0x28] sm:$0xff]
        %v1003 = vld [vmem:[%s3 + $0x30] sm:$0xff]
        %v1004 = vld [vmem:[%s3 + $0x38] sm:$0xff]
        %v1005 = vld [vmem:[%s3 + $0x40] sm:$0xff]
        %v1006 = vld [vmem:[%s3 + $0x48] sm:$0xff]
        %v1007 = vld [vmem:[%s3 + $0x50] sm:$0xff]
        %v1008 = vld [vmem:[%s3 + $0x58] sm:$0xff]
        %v1009 = vld [vmem:[%s3 + $0x60] sm:$0xff]
        %v1010 = vld [vmem:[%s3 + $0x68] sm:$0xff]
        %v1011 = vld [vmem:[%s3 + $0x70] sm:$0xff]
        %v1012 = vld [vmem:[%s3 + $0x78] sm:$0xff]
        %v1013 = vld [vmem:[%s4] sm:$0x1]
        %v1015 = vlaneseq
        %v1016 = vshrl.u32 %v1015, 7
        %v1017 = vsub.s32 0, %v1016
        %v1018 = vrot.slane %v1013, %v1017
        %1020 = vmatprep.subr.mxu0 0.0
        %1021 = vmatpush1.msra.mxu0 %v997
        %1022 = vmatprep.subr.mxu0 0.0
        %1023 = vmatpush1.msra.mxu0 %v998
        %1024 = vmatprep.subr.mxu0 0.0
        %1025 = vmatpush1.msra.mxu0 %v999
        %1026 = vmatprep.subr.mxu0 0.0
        %1027 = vmatpush1.msra.mxu0 %v1000
        %1028 = vmatprep.subr.mxu0 0.0
        %1029 = vmatpush1.msra.mxu0 %v1001
        %1030 = vmatprep.subr.mxu0 0.0
        %1031 = vmatpush1.msra.mxu0 %v1002
        %1032 = vmatprep.subr.mxu0 0.0
        %1033 = vmatpush1.msra.mxu0 %v1003
        %1034 = vmatprep.subr.mxu0 0.0
        %1035 = vmatpush1.msra.mxu0 %v1004
        %1036 = vmatprep.subr.mxu0 0.0
        %1037 = vmatpush1.msra.mxu0 %v1005
        %1038 = vmatprep.subr.mxu0 0.0
        %1039 = vmatpush1.msra.mxu0 %v1006
        %1040 = vmatprep.subr.mxu0 0.0
        %1041 = vmatpush1.msra.mxu0 %v1007
        %1042 = vmatprep.subr.mxu0 0.0
        %1043 = vmatpush1.msra.mxu0 %v1008
        %1044 = vmatprep.subr.mxu0 0.0
        %1045 = vmatpush1.msra.mxu0 %v1009
        %1046 = vmatprep.subr.mxu0 0.0
        %1047 = vmatpush1.msra.mxu0 %v1010
        %1048 = vmatprep.subr.mxu0 0.0
        %1049 = vmatpush1.msra.mxu0 %v1011
        %1050 = vmatprep.subr.mxu0 0.0
        %1051 = vmatpush1.msra.mxu0 %v1012
        %1052 = vmatprep.subr.mxu0 0.0
        %1053 = vmatpush1.msra.mxu0 0.0
        %1054 = vmatprep.subr.mxu0 0.0
        %1055 = vmatpush1.msra.mxu0 0.0
        %1056 = vmatprep.subr.mxu0 0.0
        %1057 = vmatpush1.msra.mxu0 0.0
        %1058 = vmatprep.subr.mxu0 0.0
        %1059 = vmatpush1.msra.mxu0 0.0
        %1060 = vmatprep.subr.mxu0 0.0
        %1061 = vmatpush1.msra.mxu0 0.0
        %1062 = vmatprep.subr.mxu0 0.0
        %1063 = vmatpush1.msra.mxu0 0.0
        %1064 = vmatprep.subr.mxu0 0.0
        %1065 = vmatpush1.msra.mxu0 0.0
        %1066 = vmatprep.subr.mxu0 0.0
        %1067 = vmatpush1.msra.mxu0 0.0
        %1068 = vmatprep.subr.mxu0 0.0
        %1069 = vmatpush1.msra.mxu0 0.0
        %1070 = vmatprep.subr.mxu0 0.0
        %1071 = vmatpush1.msra.mxu0 0.0
        %1072 = vmatprep.subr.mxu0 0.0
        %1073 = vmatpush1.msra.mxu0 0.0
        %1074 = vmatprep.subr.mxu0 0.0
        %1075 = vmatpush1.msra.mxu0 0.0
        %1076 = vmatprep.subr.mxu0 0.0
        %1077 = vmatpush1.msra.mxu0 0.0
        %1078 = vmatprep.subr.mxu0 0.0
        %1079 = vmatpush1.msra.mxu0 0.0
        %1080 = vmatprep.subr.mxu0 0.0
        %1081 = vmatpush1.msra.mxu0 0.0
        %1082 = vmatprep.subr.mxu0 0.0
        %1083 = vmatpush1.msra.mxu0 0.0
        %1084 = vmatprep.mubr.f32.mxu0 0.0
        %1085 = vmatmul.mubr.f32.gmra.mrb[0].mxu0 %v933
        %v1086 = vpop.f32.mrb[0].mxu0
        %v1087 = vadd.f32 %v1018, %v1086
        %v1088 = vpop.f32.mrb[0].mxu0
        %1089 = vmatprep.mubr.f32.mxu0 0.0
        %1090 = vmatmul.mubr.f32.gmra.mrb[0].mxu0 %v934
        %v1091 = vpop.f32.mrb[0].mxu0
        %v1092 = vadd.f32 %v1018, %v1091
        %v1093 = vpop.f32.mrb[0].mxu0
        %1094 = vmatprep.mubr.f32.mxu0 0.0
        %1095 = vmatmul.mubr.f32.gmra.mrb[0].mxu0 %v935
        %v1096 = vpop.f32.mrb[0].mxu0
        %v1097 = vadd.f32 %v1018, %v1096
        %v1098 = vpop.f32.mrb[0].mxu0
        %1099 = vmatprep.mubr.f32.mxu0 0.0
        %1100 = vmatmul.mubr.f32.gmra.mrb[0].mxu0 %v936
        %v1101 = vpop.f32.mrb[0].mxu0
        %v1102 = vadd.f32 %v1018, %v1101
        %v1103 = vpop.f32.mrb[0].mxu0
        %1104 = vmatprep.mubr.f32.mxu0 0.0
        %1105 = vmatmul.mubr.f32.gmra.mrb[0].mxu0 %v937
        %v1106 = vpop.f32.mrb[0].mxu0
        %v1107 = vadd.f32 %v1018, %v1106
        %v1108 = vpop.f32.mrb[0].mxu0
        %1109 = vmatprep.mubr.f32.mxu0 0.0
        %1110 = vmatmul.mubr.f32.gmra.mrb[0].mxu0 %v938
        %v1111 = vpop.f32.mrb[0].mxu0
        %v1112 = vadd.f32 %v1018, %v1111
        %v1113 = vpop.f32.mrb[0].mxu0
        %1114 = vmatprep.mubr.f32.mxu0 0.0
        %1115 = vmatmul.mubr.f32.gmra.mrb[0].mxu0 %v939
        %v1116 = vpop.f32.mrb[0].mxu0
        %v1117 = vadd.f32 %v1018, %v1116
        %v1118 = vpop.f32.mrb[0].mxu0
        %1119 = vmatprep.mubr.f32.mxu0 0.0
        %1120 = vmatmul.mubr.f32.gmra.mrb[0].mxu0 %v940
        %v1121 = vpop.f32.mrb[0].mxu0
        %v1122 = vadd.f32 %v1018, %v1121
        %v1123 = vpop.f32.mrb[0].mxu0
        %1124 = vmatprep.mubr.f32.mxu0 0.0
        %1125 = vmatmul.mubr.f32.gmra.mrb[0].mxu0 %v941
        %v1126 = vpop.f32.mrb[0].mxu0
        %v1127 = vadd.f32 %v1018, %v1126
        %v1128 = vpop.f32.mrb[0].mxu0
        %1129 = vmatprep.mubr.f32.mxu0 0.0
        %1130 = vmatmul.mubr.f32.gmra.mrb[0].mxu0 %v942
        %v1131 = vpop.f32.mrb[0].mxu0
        %v1132 = vadd.f32 %v1018, %v1131
        %v1133 = vpop.f32.mrb[0].mxu0
        %1134 = vmatprep.mubr.f32.mxu0 0.0
        %1135 = vmatmul.mubr.f32.gmra.mrb[0].mxu0 %v943
        %v1136 = vpop.f32.mrb[0].mxu0
        %v1137 = vadd.f32 %v1018, %v1136
        %v1138 = vpop.f32.mrb[0].mxu0
        %1139 = vmatprep.mubr.f32.mxu0 0.0
        %1140 = vmatmul.mubr.f32.gmra.mrb[0].mxu0 %v944
        %v1141 = vpop.f32.mrb[0].mxu0
        %v1142 = vadd.f32 %v1018, %v1141
        %v1143 = vpop.f32.mrb[0].mxu0
        %1144 = vmatprep.mubr.f32.mxu0 0.0
        %1145 = vmatmul.mubr.f32.gmra.mrb[0].mxu0 %v945
        %v1146 = vpop.f32.mrb[0].mxu0
        %v1147 = vadd.f32 %v1018, %v1146
        %v1148 = vpop.f32.mrb[0].mxu0
        %1149 = vmatprep.mubr.f32.mxu0 0.0
        %1150 = vmatmul.mubr.f32.gmra.mrb[0].mxu0 %v946
        %v1151 = vpop.f32.mrb[0].mxu0
        %v1152 = vadd.f32 %v1018, %v1151
        %v1153 = vpop.f32.mrb[0].mxu0
        %1154 = vmatprep.mubr.f32.mxu0 0.0
        %1155 = vmatmul.mubr.f32.gmra.mrb[0].mxu0 %v947
        %v1156 = vpop.f32.mrb[0].mxu0
        %v1157 = vadd.f32 %v1018, %v1156
        %v1158 = vpop.f32.mrb[0].mxu0
        %1159 = vmatprep.mubr.f32.mxu0 0.0
        %1160 = vmatmul.mubr.f32.gmra.mrb[0].mxu0 %v948
        %v1161 = vpop.f32.mrb[0].mxu0
        %v1162 = vadd.f32 %v1018, %v1161
        %v1163 = vpop.f32.mrb[0].mxu0
        %1164 = vmatprep.mubr.f32.mxu0 0.0
        %1165 = vmatmul.mubr.f32.gmra.mrb[0].mxu0 %v949
        %v1166 = vpop.f32.mrb[0].mxu0
        %v1167 = vadd.f32 %v1018, %v1166
        %v1168 = vpop.f32.mrb[0].mxu0
        %1169 = vmatprep.mubr.f32.mxu0 0.0
        %1170 = vmatmul.mubr.f32.gmra.mrb[0].mxu0 %v950
        %v1171 = vpop.f32.mrb[0].mxu0
        %v1172 = vadd.f32 %v1018, %v1171
        %v1173 = vpop.f32.mrb[0].mxu0
        %1174 = vmatprep.mubr.f32.mxu0 0.0
        %1175 = vmatmul.mubr.f32.gmra.mrb[0].mxu0 %v951
        %v1176 = vpop.f32.mrb[0].mxu0
        %v1177 = vadd.f32 %v1018, %v1176
        %v1178 = vpop.f32.mrb[0].mxu0
        %1179 = vmatprep.mubr.f32.mxu0 0.0
        %1180 = vmatmul.mubr.f32.gmra.mrb[0].mxu0 %v952
        %v1181 = vpop.f32.mrb[0].mxu0
        %v1182 = vadd.f32 %v1018, %v1181
        %v1183 = vpop.f32.mrb[0].mxu0
        %1184 = vmatprep.mubr.f32.mxu0 0.0
        %1185 = vmatmul.mubr.f32.gmra.mrb[0].mxu0 %v953
        %v1186 = vpop.f32.mrb[0].mxu0
        %v1187 = vadd.f32 %v1018, %v1186
        %v1188 = vpop.f32.mrb[0].mxu0
        %1189 = vmatprep.mubr.f32.mxu0 0.0
        %1190 = vmatmul.mubr.f32.gmra.mrb[0].mxu0 %v954
        %v1191 = vpop.f32.mrb[0].mxu0
        %v1192 = vadd.f32 %v1018, %v1191
        %v1193 = vpop.f32.mrb[0].mxu0
        %1194 = vmatprep.mubr.f32.mxu0 0.0
        %1195 = vmatmul.mubr.f32.gmra.mrb[0].mxu0 %v955
        %v1196 = vpop.f32.mrb[0].mxu0
        %v1197 = vadd.f32 %v1018, %v1196
        %v1198 = vpop.f32.mrb[0].mxu0
        %1199 = vmatprep.mubr.f32.mxu0 0.0
        %1200 = vmatmul.mubr.f32.gmra.mrb[0].mxu0 %v956
        %v1201 = vpop.f32.mrb[0].mxu0
        %v1202 = vadd.f32 %v1018, %v1201
        %v1203 = vpop.f32.mrb[0].mxu0
        %1204 = vmatprep.mubr.f32.mxu0 0.0
        %1205 = vmatmul.mubr.f32.gmra.mrb[0].mxu0 %v957
        %v1206 = vpop.f32.mrb[0].mxu0
        %v1207 = vadd.f32 %v1018, %v1206
        %v1208 = vpop.f32.mrb[0].mxu0
        %1209 = vmatprep.mubr.f32.mxu0 0.0
        %1210 = vmatmul.mubr.f32.gmra.mrb[0].mxu0 %v958
        %v1211 = vpop.f32.mrb[0].mxu0
        %v1212 = vadd.f32 %v1018, %v1211
        %v1213 = vpop.f32.mrb[0].mxu0
        %1214 = vmatprep.mubr.f32.mxu0 0.0
        %1215 = vmatmul.mubr.f32.gmra.mrb[0].mxu0 %v959
        %v1216 = vpop.f32.mrb[0].mxu0
        %v1217 = vadd.f32 %v1018, %v1216
        %v1218 = vpop.f32.mrb[0].mxu0
        %1219 = vmatprep.mubr.f32.mxu0 0.0
        %1220 = vmatmul.mubr.f32.gmra.mrb[0].mxu0 %v960
        %v1221 = vpop.f32.mrb[0].mxu0
        %v1222 = vadd.f32 %v1018, %v1221
        %v1223 = vpop.f32.mrb[0].mxu0
        %1224 = vmatprep.mubr.f32.mxu0 0.0
        %1225 = vmatmul.mubr.f32.gmra.mrb[0].mxu0 %v961
        %v1226 = vpop.f32.mrb[0].mxu0
        %v1227 = vadd.f32 %v1018, %v1226
        %v1228 = vpop.f32.mrb[0].mxu0
        %1229 = vmatprep.mubr.f32.mxu0 0.0
        %1230 = vmatmul.mubr.f32.gmra.mrb[0].mxu0 %v962
        %v1231 = vpop.f32.mrb[0].mxu0
        %v1232 = vadd.f32 %v1018, %v1231
        %v1233 = vpop.f32.mrb[0].mxu0
        %1234 = vmatprep.mubr.f32.mxu0 0.0
        %1235 = vmatmul.mubr.f32.gmra.mrb[0].mxu0 %v963
        %v1236 = vpop.f32.mrb[0].mxu0
        %v1237 = vadd.f32 %v1018, %v1236
        %v1238 = vpop.f32.mrb[0].mxu0
        %1239 = vmatprep.mubr.f32.mxu0 0.0
        %1240 = vmatmul.mubr.f32.gmra.mrb[0].mxu0 %v964
        %v1241 = vpop.f32.mrb[0].mxu0
        %v1242 = vadd.f32 %v1018, %v1241
        %v1243 = vpop.f32.mrb[0].mxu0
        %1244 = vmatprep.mubr.f32.mxu0 0.0
        %1245 = vmatmul.mubr.f32.gmra.mrb[0].mxu0 %v965
        %v1246 = vpop.f32.mrb[0].mxu0
        %v1247 = vadd.f32 %v1018, %v1246
        %v1248 = vpop.f32.mrb[0].mxu0
        %1249 = vmatprep.mubr.f32.mxu0 0.0
        %1250 = vmatmul.mubr.f32.gmra.mrb[0].mxu0 %v966
        %v1251 = vpop.f32.mrb[0].mxu0
        %v1252 = vadd.f32 %v1018, %v1251
        %v1253 = vpop.f32.mrb[0].mxu0
        %1254 = vmatprep.mubr.f32.mxu0 0.0
        %1255 = vmatmul.mubr.f32.gmra.mrb[0].mxu0 %v967
        %v1256 = vpop.f32.mrb[0].mxu0
        %v1257 = vadd.f32 %v1018, %v1256
        %v1258 = vpop.f32.mrb[0].mxu0
        %1259 = vmatprep.mubr.f32.mxu0 0.0
        %1260 = vmatmul.mubr.f32.gmra.mrb[0].mxu0 %v968
        %v1261 = vpop.f32.mrb[0].mxu0
        %v1262 = vadd.f32 %v1018, %v1261
        %v1263 = vpop.f32.mrb[0].mxu0
        %1264 = vmatprep.mubr.f32.mxu0 0.0
        %1265 = vmatmul.mubr.f32.gmra.mrb[0].mxu0 %v969
        %v1266 = vpop.f32.mrb[0].mxu0
        %v1267 = vadd.f32 %v1018, %v1266
        %v1268 = vpop.f32.mrb[0].mxu0
        %1269 = vmatprep.mubr.f32.mxu0 0.0
        %1270 = vmatmul.mubr.f32.gmra.mrb[0].mxu0 %v970
        %v1271 = vpop.f32.mrb[0].mxu0
        %v1272 = vadd.f32 %v1018, %v1271
        %v1273 = vpop.f32.mrb[0].mxu0
        %1274 = vmatprep.mubr.f32.mxu0 0.0
        %1275 = vmatmul.mubr.f32.gmra.mrb[0].mxu0 %v971
        %v1276 = vpop.f32.mrb[0].mxu0
        %v1277 = vadd.f32 %v1018, %v1276
        %v1278 = vpop.f32.mrb[0].mxu0
        %1279 = vmatprep.mubr.f32.mxu0 0.0
        %1280 = vmatmul.mubr.f32.gmra.mrb[0].mxu0 %v972
        %v1281 = vpop.f32.mrb[0].mxu0
        %v1282 = vadd.f32 %v1018, %v1281
        %v1283 = vpop.f32.mrb[0].mxu0
        %1284 = vmatprep.mubr.f32.mxu0 0.0
        %1285 = vmatmul.mubr.f32.gmra.mrb[0].mxu0 %v973
        %v1286 = vpop.f32.mrb[0].mxu0
        %v1287 = vadd.f32 %v1018, %v1286
        %v1288 = vpop.f32.mrb[0].mxu0
        %1289 = vmatprep.mubr.f32.mxu0 0.0
        %1290 = vmatmul.mubr.f32.gmra.mrb[0].mxu0 %v974
        %v1291 = vpop.f32.mrb[0].mxu0
        %v1292 = vadd.f32 %v1018, %v1291
        %v1293 = vpop.f32.mrb[0].mxu0
        %1294 = vmatprep.mubr.f32.mxu0 0.0
        %1295 = vmatmul.mubr.f32.gmra.mrb[0].mxu0 %v975
        %v1296 = vpop.f32.mrb[0].mxu0
        %v1297 = vadd.f32 %v1018, %v1296
        %v1298 = vpop.f32.mrb[0].mxu0
        %1299 = vmatprep.mubr.f32.mxu0 0.0
        %1300 = vmatmul.mubr.f32.gmra.mrb[0].mxu0 %v976
        %v1301 = vpop.f32.mrb[0].mxu0
        %v1302 = vadd.f32 %v1018, %v1301
        %v1303 = vpop.f32.mrb[0].mxu0
        %1304 = vmatprep.mubr.f32.mxu0 0.0
        %1305 = vmatmul.mubr.f32.gmra.mrb[0].mxu0 %v977
        %v1306 = vpop.f32.mrb[0].mxu0
        %v1307 = vadd.f32 %v1018, %v1306
        %v1308 = vpop.f32.mrb[0].mxu0
        %1309 = vmatprep.mubr.f32.mxu0 0.0
        %1310 = vmatmul.mubr.f32.gmra.mrb[0].mxu0 %v978
        %v1311 = vpop.f32.mrb[0].mxu0
        %v1312 = vadd.f32 %v1018, %v1311
        %v1313 = vpop.f32.mrb[0].mxu0
        %1314 = vmatprep.mubr.f32.mxu0 0.0
        %1315 = vmatmul.mubr.f32.gmra.mrb[0].mxu0 %v979
        %v1316 = vpop.f32.mrb[0].mxu0
        %v1317 = vadd.f32 %v1018, %v1316
        %v1318 = vpop.f32.mrb[0].mxu0
        %1319 = vmatprep.mubr.f32.mxu0 0.0
        %1320 = vmatmul.mubr.f32.gmra.mrb[0].mxu0 %v980
        %v1321 = vpop.f32.mrb[0].mxu0
        %v1322 = vadd.f32 %v1018, %v1321
        %v1323 = vpop.f32.mrb[0].mxu0
        %1324 = vmatprep.mubr.f32.mxu0 0.0
        %1325 = vmatmul.mubr.f32.gmra.mrb[0].mxu0 %v981
        %v1326 = vpop.f32.mrb[0].mxu0
        %v1327 = vadd.f32 %v1018, %v1326
        %v1328 = vpop.f32.mrb[0].mxu0
        %1329 = vmatprep.mubr.f32.mxu0 0.0
        %1330 = vmatmul.mubr.f32.gmra.mrb[0].mxu0 %v982
        %v1331 = vpop.f32.mrb[0].mxu0
        %v1332 = vadd.f32 %v1018, %v1331
        %v1333 = vpop.f32.mrb[0].mxu0
        %1334 = vmatprep.mubr.f32.mxu0 0.0
        %1335 = vmatmul.mubr.f32.gmra.mrb[0].mxu0 %v983
        %v1336 = vpop.f32.mrb[0].mxu0
        %v1337 = vadd.f32 %v1018, %v1336
        %v1338 = vpop.f32.mrb[0].mxu0
        %1339 = vmatprep.mubr.f32.mxu0 0.0
        %1340 = vmatmul.mubr.f32.gmra.mrb[0].mxu0 %v984
        %v1341 = vpop.f32.mrb[0].mxu0
        %v1342 = vadd.f32 %v1018, %v1341
        %v1343 = vpop.f32.mrb[0].mxu0
        %1344 = vmatprep.mubr.f32.mxu0 0.0
        %1345 = vmatmul.mubr.f32.gmra.mrb[0].mxu0 %v985
        %v1346 = vpop.f32.mrb[0].mxu0
        %v1347 = vadd.f32 %v1018, %v1346
        %v1348 = vpop.f32.mrb[0].mxu0
        %1349 = vmatprep.mubr.f32.mxu0 0.0
        %1350 = vmatmul.mubr.f32.gmra.mrb[0].mxu0 %v986
        %v1351 = vpop.f32.mrb[0].mxu0
        %v1352 = vadd.f32 %v1018, %v1351
        %v1353 = vpop.f32.mrb[0].mxu0
        %1354 = vmatprep.mubr.f32.mxu0 0.0
        %1355 = vmatmul.mubr.f32.gmra.mrb[0].mxu0 %v987
        %v1356 = vpop.f32.mrb[0].mxu0
        %v1357 = vadd.f32 %v1018, %v1356
        %v1358 = vpop.f32.mrb[0].mxu0
        %1359 = vmatprep.mubr.f32.mxu0 0.0
        %1360 = vmatmul.mubr.f32.gmra.mrb[0].mxu0 %v988
        %v1361 = vpop.f32.mrb[0].mxu0
        %v1362 = vadd.f32 %v1018, %v1361
        %v1363 = vpop.f32.mrb[0].mxu0
        %1364 = vmatprep.mubr.f32.mxu0 0.0
        %1365 = vmatmul.mubr.f32.gmra.mrb[0].mxu0 %v989
        %v1366 = vpop.f32.mrb[0].mxu0
        %v1367 = vadd.f32 %v1018, %v1366
        %v1368 = vpop.f32.mrb[0].mxu0
        %1369 = vmatprep.mubr.f32.mxu0 0.0
        %1370 = vmatmul.mubr.f32.gmra.mrb[0].mxu0 %v990
        %v1371 = vpop.f32.mrb[0].mxu0
        %v1372 = vadd.f32 %v1018, %v1371
        %v1373 = vpop.f32.mrb[0].mxu0
        %1374 = vmatprep.mubr.f32.mxu0 0.0
        %1375 = vmatmul.mubr.f32.gmra.mrb[0].mxu0 %v991
        %v1376 = vpop.f32.mrb[0].mxu0
        %v1377 = vadd.f32 %v1018, %v1376
        %v1378 = vpop.f32.mrb[0].mxu0
        %1379 = vmatprep.mubr.f32.mxu0 0.0
        %1380 = vmatmul.mubr.f32.gmra.mrb[0].mxu0 %v992
        %v1381 = vpop.f32.mrb[0].mxu0
        %v1382 = vadd.f32 %v1018, %v1381
        %v1383 = vpop.f32.mrb[0].mxu0
        %1384 = vmatprep.mubr.f32.mxu0 0.0
        %1385 = vmatmul.mubr.f32.gmra.mrb[0].mxu0 %v993
        %v1386 = vpop.f32.mrb[0].mxu0
        %v1387 = vadd.f32 %v1018, %v1386
        %v1388 = vpop.f32.mrb[0].mxu0
        %1389 = vmatprep.mubr.f32.mxu0 0.0
        %1390 = vmatmul.mubr.f32.gmra.mrb[0].mxu0 %v994
        %v1391 = vpop.f32.mrb[0].mxu0
        %v1392 = vadd.f32 %v1018, %v1391
        %v1393 = vpop.f32.mrb[0].mxu0
        %1394 = vmatprep.mubr.f32.mxu0 0.0
        %1395 = vmatmul.mubr.f32.gmra.mrb[0].mxu0 %v995
        %v1396 = vpop.f32.mrb[0].mxu0
        %v1397 = vadd.f32 %v1018, %v1396
        %v1398 = vpop.f32.mrb[0].mxu0
        %1399 = vmatprep.mubr.f32.mxu0 0.0
        %1400 = vmatmul.mubr.f32.gmra.mrb[0].mxu0 %v996
        %v1401 = vpop.f32.mrb[0].mxu0
        %v1402 = vadd.f32 %v1018, %v1401
        %v1403 = vpop.f32.mrb[0].mxu0
        %1404 = vdwg.mxu0
        %v1405 = vmax.f32 %v1087, 0.0
        %v1406 = vmax.f32 %v1092, 0.0
        %v1407 = vmax.f32 %v1097, 0.0
        %v1408 = vmax.f32 %v1102, 0.0
        %v1409 = vmax.f32 %v1107, 0.0
        %v1410 = vmax.f32 %v1112, 0.0
        %v1411 = vmax.f32 %v1117, 0.0
        %v1412 = vmax.f32 %v1122, 0.0
        %v1413 = vmax.f32 %v1127, 0.0
        %v1414 = vmax.f32 %v1132, 0.0
        %v1415 = vmax.f32 %v1137, 0.0
        %v1416 = vmax.f32 %v1142, 0.0
        %v1417 = vmax.f32 %v1147, 0.0
        %v1418 = vmax.f32 %v1152, 0.0
        %v1419 = vmax.f32 %v1157, 0.0
        %v1420 = vmax.f32 %v1162, 0.0
        %v1421 = vmax.f32 %v1167, 0.0
        %v1422 = vmax.f32 %v1172, 0.0
        %v1423 = vmax.f32 %v1177, 0.0
        %v1424 = vmax.f32 %v1182, 0.0
        %v1425 = vmax.f32 %v1187, 0.0
        %v1426 = vmax.f32 %v1192, 0.0
        %v1427 = vmax.f32 %v1197, 0.0
        %v1428 = vmax.f32 %v1202, 0.0
        %v1429 = vmax.f32 %v1207, 0.0
        %v1430 = vmax.f32 %v1212, 0.0
        %v1431 = vmax.f32 %v1217, 0.0
        %v1432 = vmax.f32 %v1222, 0.0
        %v1433 = vmax.f32 %v1227, 0.0
        %v1434 = vmax.f32 %v1232, 0.0
        %v1435 = vmax.f32 %v1237, 0.0
        %v1436 = vmax.f32 %v1242, 0.0
        %v1437 = vmax.f32 %v1247, 0.0
        %v1438 = vmax.f32 %v1252, 0.0
        %v1439 = vmax.f32 %v1257, 0.0
        %v1440 = vmax.f32 %v1262, 0.0
        %v1441 = vmax.f32 %v1267, 0.0
        %v1442 = vmax.f32 %v1272, 0.0
        %v1443 = vmax.f32 %v1277, 0.0
        %v1444 = vmax.f32 %v1282, 0.0
        %v1445 = vmax.f32 %v1287, 0.0
        %v1446 = vmax.f32 %v1292, 0.0
        %v1447 = vmax.f32 %v1297, 0.0
        %v1448 = vmax.f32 %v1302, 0.0
        %v1449 = vmax.f32 %v1307, 0.0
        %v1450 = vmax.f32 %v1312, 0.0
        %v1451 = vmax.f32 %v1317, 0.0
        %v1452 = vmax.f32 %v1322, 0.0
        %v1453 = vmax.f32 %v1327, 0.0
        %v1454 = vmax.f32 %v1332, 0.0
        %v1455 = vmax.f32 %v1337, 0.0
        %v1456 = vmax.f32 %v1342, 0.0
        %v1457 = vmax.f32 %v1347, 0.0
        %v1458 = vmax.f32 %v1352, 0.0
        %v1459 = vmax.f32 %v1357, 0.0
        %v1460 = vmax.f32 %v1362, 0.0
        %v1461 = vmax.f32 %v1367, 0.0
        %v1462 = vmax.f32 %v1372, 0.0
        %v1463 = vmax.f32 %v1377, 0.0
        %v1464 = vmax.f32 %v1382, 0.0
        %v1465 = vmax.f32 %v1387, 0.0
        %v1466 = vmax.f32 %v1392, 0.0
        %v1467 = vmax.f32 %v1397, 0.0
        %v1468 = vmax.f32 %v1402, 0.0
        %v1469 = vld [vmem:[%s5] sm:$0x1]
        %v1470 = vld [vmem:[#allocation2] sm:$0x1]
        %1472 = vset.pattern.permute.xlu0 0
        %1473 = vperm.xlu0 %1472, %v1470
        %v1474 = vpop.permute.xlu0 %1473
        %v1476 = vlaneseq
        %v1477 = vshrl.u32 %v1476, 7
        %v1478 = vsub.s32 0, %v1477
        %v1479 = vrot.slane %v1474, %v1478
        %vm1480 = vcmask 523264
        %v1482 = vsel %vm1480, %v1469, 0
        %v1485 = vsel %vm1480, %v1405, 0
        %v1488 = vsel %vm1480, %v1406, 0
        %v1491 = vsel %vm1480, %v1407, 0
        %v1494 = vsel %vm1480, %v1408, 0
        %v1497 = vsel %vm1480, %v1409, 0
        %v1500 = vsel %vm1480, %v1410, 0
        %v1503 = vsel %vm1480, %v1411, 0
        %v1506 = vsel %vm1480, %v1412, 0
        %v1509 = vsel %vm1480, %v1413, 0
        %v1512 = vsel %vm1480, %v1414, 0
        %v1515 = vsel %vm1480, %v1415, 0
        %v1518 = vsel %vm1480, %v1416, 0
        %v1521 = vsel %vm1480, %v1417, 0
        %v1524 = vsel %vm1480, %v1418, 0
        %v1527 = vsel %vm1480, %v1419, 0
        %v1530 = vsel %vm1480, %v1420, 0
        %v1533 = vsel %vm1480, %v1421, 0
        %v1536 = vsel %vm1480, %v1422, 0
        %v1539 = vsel %vm1480, %v1423, 0
        %v1542 = vsel %vm1480, %v1424, 0
        %v1545 = vsel %vm1480, %v1425, 0
        %v1548 = vsel %vm1480, %v1426, 0
        %v1551 = vsel %vm1480, %v1427, 0
        %v1554 = vsel %vm1480, %v1428, 0
        %v1557 = vsel %vm1480, %v1429, 0
        %v1560 = vsel %vm1480, %v1430, 0
        %v1563 = vsel %vm1480, %v1431, 0
        %v1566 = vsel %vm1480, %v1432, 0
        %v1569 = vsel %vm1480, %v1433, 0
        %v1572 = vsel %vm1480, %v1434, 0
        %v1575 = vsel %vm1480, %v1435, 0
        %v1578 = vsel %vm1480, %v1436, 0
        %v1581 = vsel %vm1480, %v1437, 0
        %v1584 = vsel %vm1480, %v1438, 0
        %v1587 = vsel %vm1480, %v1439, 0
        %v1590 = vsel %vm1480, %v1440, 0
        %v1593 = vsel %vm1480, %v1441, 0
        %v1596 = vsel %vm1480, %v1442, 0
        %v1599 = vsel %vm1480, %v1443, 0
        %v1602 = vsel %vm1480, %v1444, 0
        %v1605 = vsel %vm1480, %v1445, 0
        %v1608 = vsel %vm1480, %v1446, 0
        %v1611 = vsel %vm1480, %v1447, 0
        %v1614 = vsel %vm1480, %v1448, 0
        %v1617 = vsel %vm1480, %v1449, 0
        %v1620 = vsel %vm1480, %v1450, 0
        %v1623 = vsel %vm1480, %v1451, 0
        %v1626 = vsel %vm1480, %v1452, 0
        %v1629 = vsel %vm1480, %v1453, 0
        %v1632 = vsel %vm1480, %v1454, 0
        %v1635 = vsel %vm1480, %v1455, 0
        %v1638 = vsel %vm1480, %v1456, 0
        %v1641 = vsel %vm1480, %v1457, 0
        %v1644 = vsel %vm1480, %v1458, 0
        %v1647 = vsel %vm1480, %v1459, 0
        %v1650 = vsel %vm1480, %v1460, 0
        %v1653 = vsel %vm1480, %v1461, 0
        %v1656 = vsel %vm1480, %v1462, 0
        %v1659 = vsel %vm1480, %v1463, 0
        %v1662 = vsel %vm1480, %v1464, 0
        %v1665 = vsel %vm1480, %v1465, 0
        %v1668 = vsel %vm1480, %v1466, 0
        %v1671 = vsel %vm1480, %v1467, 0
        %v1674 = vsel %vm1480, %v1468, 0
        %1676 = vmatprep.subr.mxu0 0.0
        %1677 = vmatpush1.xpose.msra.mxu0 %v1485
        %1678 = vmatprep.subr.mxu0 0.0
        %1679 = vmatpush1.xpose.msra.mxu0 %v1488
        %1680 = vmatprep.subr.mxu0 0.0
        %1681 = vmatpush1.xpose.msra.mxu0 %v1491
        %1682 = vmatprep.subr.mxu0 0.0
        %1683 = vmatpush1.xpose.msra.mxu0 %v1494
        %1684 = vmatprep.subr.mxu0 0.0
        %1685 = vmatpush1.xpose.msra.mxu0 %v1497
        %1686 = vmatprep.subr.mxu0 0.0
        %1687 = vmatpush1.xpose.msra.mxu0 %v1500
        %1688 = vmatprep.subr.mxu0 0.0
        %1689 = vmatpush1.xpose.msra.mxu0 %v1503
        %1690 = vmatprep.subr.mxu0 0.0
        %1691 = vmatpush1.xpose.msra.mxu0 %v1506
        %1692 = vmatprep.subr.mxu0 0.0
        %1693 = vmatpush1.xpose.msra.mxu0 %v1509
        %1694 = vmatprep.subr.mxu0 0.0
        %1695 = vmatpush1.xpose.msra.mxu0 %v1512
        %1696 = vmatprep.subr.mxu0 0.0
        %1697 = vmatpush1.xpose.msra.mxu0 %v1515
        %1698 = vmatprep.subr.mxu0 0.0
        %1699 = vmatpush1.xpose.msra.mxu0 %v1518
        %1700 = vmatprep.subr.mxu0 0.0
        %1701 = vmatpush1.xpose.msra.mxu0 %v1521
        %1702 = vmatprep.subr.mxu0 0.0
        %1703 = vmatpush1.xpose.msra.mxu0 %v1524
        %1704 = vmatprep.subr.mxu0 0.0
        %1705 = vmatpush1.xpose.msra.mxu0 %v1527
        %1706 = vmatprep.subr.mxu0 0.0
        %1707 = vmatpush1.xpose.msra.mxu0 %v1530
        %1708 = vmatprep.subr.mxu0 0.0
        %1709 = vmatpush1.xpose.msra.mxu0 %v1533
        %1710 = vmatprep.subr.mxu0 0.0
        %1711 = vmatpush1.xpose.msra.mxu0 %v1536
        %1712 = vmatprep.subr.mxu0 0.0
        %1713 = vmatpush1.xpose.msra.mxu0 %v1539
        %1714 = vmatprep.subr.mxu0 0.0
        %1715 = vmatpush1.xpose.msra.mxu0 %v1542
        %1716 = vmatprep.subr.mxu0 0.0
        %1717 = vmatpush1.xpose.msra.mxu0 %v1545
        %1718 = vmatprep.subr.mxu0 0.0
        %1719 = vmatpush1.xpose.msra.mxu0 %v1548
        %1720 = vmatprep.subr.mxu0 0.0
        %1721 = vmatpush1.xpose.msra.mxu0 %v1551
        %1722 = vmatprep.subr.mxu0 0.0
        %1723 = vmatpush1.xpose.msra.mxu0 %v1554
        %1724 = vmatprep.subr.mxu0 0.0
        %1725 = vmatpush1.xpose.msra.mxu0 %v1557
        %1726 = vmatprep.subr.mxu0 0.0
        %1727 = vmatpush1.xpose.msra.mxu0 %v1560
        %1728 = vmatprep.subr.mxu0 0.0
        %1729 = vmatpush1.xpose.msra.mxu0 %v1563
        %1730 = vmatprep.subr.mxu0 0.0
        %1731 = vmatpush1.xpose.msra.mxu0 %v1566
        %1732 = vmatprep.subr.mxu0 0.0
        %1733 = vmatpush1.xpose.msra.mxu0 %v1569
        %1734 = vmatprep.subr.mxu0 0.0
        %1735 = vmatpush1.xpose.msra.mxu0 %v1572
        %1736 = vmatprep.subr.mxu0 0.0
        %1737 = vmatpush1.xpose.msra.mxu0 %v1575
        %1738 = vmatprep.subr.mxu0 0.0
        %1739 = vmatpush1.xpose.msra.mxu0 %v1578
        %1740 = vmatprep.mubr.f32.mxu0 0.0
        %1741 = vmatmul.mubr.f32.gmra.mrb[0].mxu0 %v1482
        %v1742 = vpop.f32.mrb[0].mxu0
        %v1743 = vadd.f32 %v1479, %v1742
        %v1744 = vpop.f32.mrb[0].mxu0
        %v1745 = vadd.f32 %v1479, %v1744
        %1746 = vdwg.mxu0
        %1747 = vmatprep.subr.mxu0 0.0
        %1748 = vmatpush1.xpose.msra.mxu0 %v1581
        %1749 = vmatprep.subr.mxu0 0.0
        %1750 = vmatpush1.xpose.msra.mxu0 %v1584
        %1751 = vmatprep.subr.mxu0 0.0
        %1752 = vmatpush1.xpose.msra.mxu0 %v1587
        %1753 = vmatprep.subr.mxu0 0.0
        %1754 = vmatpush1.xpose.msra.mxu0 %v1590
        %1755 = vmatprep.subr.mxu0 0.0
        %1756 = vmatpush1.xpose.msra.mxu0 %v1593
        %1757 = vmatprep.subr.mxu0 0.0
        %1758 = vmatpush1.xpose.msra.mxu0 %v1596
        %1759 = vmatprep.subr.mxu0 0.0
        %1760 = vmatpush1.xpose.msra.mxu0 %v1599
        %1761 = vmatprep.subr.mxu0 0.0
        %1762 = vmatpush1.xpose.msra.mxu0 %v1602
        %1763 = vmatprep.subr.mxu0 0.0
        %1764 = vmatpush1.xpose.msra.mxu0 %v1605
        %1765 = vmatprep.subr.mxu0 0.0
        %1766 = vmatpush1.xpose.msra.mxu0 %v1608
        %1767 = vmatprep.subr.mxu0 0.0
        %1768 = vmatpush1.xpose.msra.mxu0 %v1611
        %1769 = vmatprep.subr.mxu0 0.0
        %1770 = vmatpush1.xpose.msra.mxu0 %v1614
        %1771 = vmatprep.subr.mxu0 0.0
        %1772 = vmatpush1.xpose.msra.mxu0 %v1617
        %1773 = vmatprep.subr.mxu0 0.0
        %1774 = vmatpush1.xpose.msra.mxu0 %v1620
        %1775 = vmatprep.subr.mxu0 0.0
        %1776 = vmatpush1.xpose.msra.mxu0 %v1623
        %1777 = vmatprep.subr.mxu0 0.0
        %1778 = vmatpush1.xpose.msra.mxu0 %v1626
        %1779 = vmatprep.subr.mxu0 0.0
        %1780 = vmatpush1.xpose.msra.mxu0 %v1629
        %1781 = vmatprep.subr.mxu0 0.0
        %1782 = vmatpush1.xpose.msra.mxu0 %v1632
        %1783 = vmatprep.subr.mxu0 0.0
        %1784 = vmatpush1.xpose.msra.mxu0 %v1635
        %1785 = vmatprep.subr.mxu0 0.0
        %1786 = vmatpush1.xpose.msra.mxu0 %v1638
        %1787 = vmatprep.subr.mxu0 0.0
        %1788 = vmatpush1.xpose.msra.mxu0 %v1641
        %1789 = vmatprep.subr.mxu0 0.0
        %1790 = vmatpush1.xpose.msra.mxu0 %v1644
        %1791 = vmatprep.subr.mxu0 0.0
        %1792 = vmatpush1.xpose.msra.mxu0 %v1647
        %1793 = vmatprep.subr.mxu0 0.0
        %1794 = vmatpush1.xpose.msra.mxu0 %v1650
        %1795 = vmatprep.subr.mxu0 0.0
        %1796 = vmatpush1.xpose.msra.mxu0 %v1653
        %1797 = vmatprep.subr.mxu0 0.0
        %1798 = vmatpush1.xpose.msra.mxu0 %v1656
        %1799 = vmatprep.subr.mxu0 0.0
        %1800 = vmatpush1.xpose.msra.mxu0 %v1659
        %1801 = vmatprep.subr.mxu0 0.0
        %1802 = vmatpush1.xpose.msra.mxu0 %v1662
        %1803 = vmatprep.subr.mxu0 0.0
        %1804 = vmatpush1.xpose.msra.mxu0 %v1665
        %1805 = vmatprep.subr.mxu0 0.0
        %1806 = vmatpush1.xpose.msra.mxu0 %v1668
        %1807 = vmatprep.subr.mxu0 0.0
        %1808 = vmatpush1.xpose.msra.mxu0 %v1671
        %1809 = vmatprep.subr.mxu0 0.0
        %1810 = vmatpush1.xpose.msra.mxu0 %v1674
        %1811 = vmatprep.mubr.f32.mxu0 0.0
        %1812 = vmatmul.mubr.f32.gmra.mrb[0].mxu0 %v1482
        %v1813 = vpop.f32.mrb[0].mxu0
        %v1814 = vadd.f32 %v1479, %v1813
        %v1815 = vpop.f32.mrb[0].mxu0
        %v1816 = vadd.f32 %v1479, %v1815
        %1817 = vdwg.mxu0
        %v1818 = vxor.u32 %v1743, 2147483648
        %v1819 = vxor.u32 %v1745, 2147483648
        %v1820 = vxor.u32 %v1814, 2147483648
        %v1821 = vxor.u32 %v1816, 2147483648
        %v1822 = vmul.f32 %v1818, 1.442695
        %v1823 = vpow.pop %v1822
        %v1824 = vmul.f32 %v1819, 1.442695
        %v1825 = vpow.pop %v1824
        %v1826 = vmul.f32 %v1820, 1.442695
        %v1827 = vpow.pop %v1826
        %v1828 = vmul.f32 %v1821, 1.442695
        %v1829 = vpow.pop %v1828
        %v1830 = vadd.f32 %v1823, 1.0
        %v1831 = vadd.f32 %v1825, 1.0
        %v1832 = vadd.f32 %v1827, 1.0
        %v1833 = vadd.f32 %v1829, 1.0
        %v1834 = vrcp.pop %v1830
        %v1835 = vmul.f32 1.0, %v1834
        %v1836 = vrcp.pop %v1831
        %v1837 = vmul.f32 1.0, %v1836
        %v1838 = vrcp.pop %v1832
        %v1839 = vmul.f32 1.0, %v1838
        %v1840 = vrcp.pop %v1833
        %v1841 = vmul.f32 1.0, %v1840
        %v1846 = vcombine.low %v1835, %v1837
        %v1847 = vcombine.low %v1839, %v1841
        %v1849 = vunpack.c.l.s4 1966171168
        %v1850 = vunpack.c.0.s8 %v1849
        %v1851 = vlaneseq
        %v1852 = vshrl.u32 %v1851, 7
        %v1853 = vsub.s32 %v1850, %v1852
        %v1854 = vrot.slane %v1846, %v1853
        %v1856 = vunpack.c.l.s4 1966171168
        %v1857 = vunpack.c.0.s8 %v1856
        %v1858 = vlaneseq
        %v1859 = vshrl.u32 %v1858, 7
        %v1860 = vsub.s32 %v1857, %v1859
        %v1861 = vrot.slane %v1847, %v1860
        %v1862 = vcombine.low %v1854, %v1861
        %v1864 = vunpack.c.l.s4 1966171168
        %v1865 = vunpack.c.0.s8 %v1864
        %v1866 = vlaneseq
        %v1867 = vshrl.u32 %v1866, 7
        %v1868 = vsub.s32 %v1865, %v1867
        %v1869 = vrot.slane %v1862, %v1868
        %v1871 = vlaneseq
        %vm1872 = vcmp.ge.s32.totalorder %v1871, 0
        %vm1873 = vcmp.lt.s32.totalorder %v1871, 512
        %vm1874 = vmand %vm1872, %vm1873
        %1875 = vst.msk [vmem:[%s274] sm:$0xf] %vm1874, %v1869
        %s1876 = sand.u32 %s183, 1
        %s1877 = scalar_lea.sflag [#allocation4], %s1876
        %s1878 = sand.u32 %s183, 1
        %s1879 = smul.addr %s1878, 4
        %s1880 = scalar_lea.vmem [#allocation3], %s1879
        // Predicated region
        $region49: #{mlp_forward.1} parent=47 // pred_check
          %p1881 = pneg %p193
        $region50: #{mlp_forward.1} parent=47 // pred_check_branch
          %1883 = sbr.rel (%p1881) target = $region52
        $region51: #{mlp_forward.1} parent=47 // pred_region
          %s1885 = ssub.s32 64, 64
          %1886 = vsyncadd %s1877, %s1885
          %s1887 = smul.addr %s23, 4
          %s1888 = smul.addr %s1887, 16
          %s1889 = scalar_lea.hbm %s7, %s1888
          %s1891 = sshll.u32 %s1880, 4
          %s1892 = int_to_ptr.vmem [resolvable:$true] %s1891
          %1894 = dma.vmem_to_hbm [thread:$0]  %s1892, 64, %s1889, %s1877
        $region52: #{mlp_forward.1} parent=47 // pred_fallthru
          _
      $region48: #{mlp_forward.1} parent=5 // pred_fallthru
        _
      %p1895 = scmp.le.s32.totalorder 2, %s18
      // Predicated region
      $region53: #{mlp_forward.1} parent=5 // pred_check
        %p1896 = pneg %p1895
      $region54: #{mlp_forward.1} parent=5 // pred_check_branch
        %1898 = sbr.rel (%p1896) target = $region56
      $region55: #{mlp_forward.1} parent=5 // pred_region
        %s1899 = ssub.s32 %s18, 2
        // Predicated region
        $region57: #{mlp_forward.1} parent=55 // pred_check
          %p1900 = pneg %p199
        $region58: #{mlp_forward.1} parent=55 // pred_check_branch
          %1902 = sbr.rel (%p1900) target = $region60
        $region59: #{mlp_forward.1} parent=55 // pred_region
          %s1903 = sand.u32 %s184, 1
          %s1904 = scalar_lea.sflag [#allocation4], %s1903
          %s1905 = sand.u32 %s184, 1
          %s1906 = smul.addr %s1905, 4
          %s1907 = scalar_lea.vmem [#allocation3], %s1906
          %1908 = dma.done %s1904, 64
        $region60: #{mlp_forward.1} parent=55 // pred_fallthru
          _
      $region56: #{mlp_forward.1} parent=5 // pred_fallthru
        _
    $region6: #{mlp_forward.1} parent=1 // loop_footer
      %s22 = sadd.s32 1, %s18
    $region7: #{mlp_forward.1} parent=1 // loop_footer_branch
      %17 = sbr.rel target = $region3
    $region8: #{mlp_forward.1} parent=1 // loop_exit
      _
    %1909 = vsyncpa [#allocation4], 1
    %s1910 = scalar_lea.sflag [#allocation4], 1
    %1911 = vsyncpa %s1910, 1

</llo_original>
